<compile_context>
chip_gen: v5e
topology: v5e:2x2
jax: 0.10.0
libtpu: 0.0.40
codegen_flags: <defaults>
</compile_context>

<pallas_src>
import jax
import jax.numpy as jnp
from jax import lax
from jax.experimental import pallas as pl
from jax.experimental.pallas import tpu as pltpu


def _make_kernel(T, B, E, H, C):
    G = 2 * H   # per-gate width: [forward H | backward H]

    def kernel(emb_ref,       # (T, B, E)  f32  time-major embedding (passed once)
               w_in_f_ref,    # (E, 8H)    bf16 fwd input weights in gate-interleaved cols
               w_in_b_ref,    # (E, 8H)    bf16 bwd input weights in gate-interleaved cols
               w_hh_ref,      # (2H, 8H)   bf16 block-diag, gate-interleaved recurrent weights
               b_ref,         # (1, 8H)    f32  gate-interleaved (b_ih + b_hh) for both dirs
               h0_ref,        # (B, 2H)    f32  [h0_fwd | h0_bwd]
               c0_ref,        # (B, 2H)    f32
               attw_ref,      # (1, 2H)    f32
               fcw_af_ref,    # (H, C)     f32  fc rows acting on the fwd attention features
               fcw_ab_ref,    # (H, C)     f32  fc rows acting on the bwd attention features
               fcw_e_ref,     # (E, C)     f32  fc rows acting on the raw embedding
               fcb_ref,       # (1, C)     f32
               out_ref,       # (B, C)     f32
               xp_sc,         # (T, B, 8H) f32  hoisted input projection (scratch)
               hist_f_sc,     # (T, B, 2H) f32  h_new stored at fwd time index s
               hist_b_sc):    # (T, B, 2H) f32  h_new stored at bwd time index T-1-s

        # ---- hoisted input projection: off the serial chain, bf16 MXU, aligned writes ----
        w_in_f = w_in_f_ref[...]
        w_in_b = w_in_b_ref[...]
        bias = b_ref[...]
        for s in range(T):                                  # static indices, one-time work
            x_f = emb_ref[s].astype(jnp.bfloat16)           # fwd input at time s
            x_b = emb_ref[T - 1 - s].astype(jnp.bfloat16)   # bwd input at time T-1-s
            xp_sc[s] = (jnp.dot(x_f, w_in_f, preferred_element_type=jnp.float32)
                        + jnp.dot(x_b, w_in_b, preferred_element_type=jnp.float32)
                        + bias)

        w_hh = w_hh_ref[...]                                # bf16 (2H, 8H)

        # ---- fused fwd/bwd recurrence: T steps, one (B,2H)x(2H,8H) bf16 dot per step ----
        def step(s, carry):
            h, c = carry                                    # f32 loop-carried state
            gates = xp_sc[s] + jnp.dot(h.astype(jnp.bfloat16), w_hh,
                                       preferred_element_type=jnp.float32)   # (B, 8H) f32
            # one full-width sigmoid; the wasted pass over the g columns rides the EUP slot
            sg = jax.nn.sigmoid(gates)
            i = sg[:, 0 * G:1 * G]
            f = sg[:, 1 * G:2 * G]
            o = sg[:, 3 * G:4 * G]
            g = jnp.tanh(gates[:, 2 * G:3 * G])
            c_new = f * c + i * g
            h_new = o * jnp.tanh(c_new)
            # full-block, unmasked leading-axis stores (no half-lane masked writes)
            hist_f_sc[s] = h_new            # row s:  [h_fwd(s)      | h_bwd(T-1-s)]
            hist_b_sc[T - 1 - s] = h_new    # row t:  [h_fwd(T-1-t)  | h_bwd(t)    ]
            return (h_new, c_new)

        h_last, _ = lax.fori_loop(0, T, step, (h0_ref[...], c0_ref[...]), unroll=True)

        # ---- attention: additive score decomposition, softmax over time, last step only ----
        attw = attw_ref[...]                                # (1, 2H)
        hist_f = hist_f_sc[...]                             # (T, B, 2H)
        hist_b = hist_b_sc[...]                             # (T, B, 2H)
        score = (jnp.sum(jnp.tanh(hist_f[:, :, :H]) * attw[:, :H],
                         axis=-1, keepdims=True)            # fwd contribution at time t
                 + jnp.sum(jnp.tanh(hist_b[:, :, H:]) * attw[:, H:],
                           axis=-1, keepdims=True))         # bwd contribution at time t
        score = score - jnp.max(score, axis=0, keepdims=True)   # softmax over T
        e = jnp.exp(score)                                  # (T, B, 1)
        denom = jnp.sum(e, axis=0, keepdims=True)           # (1, B, 1)
        alpha_last = e[T - 1] * pl.reciprocal(denom[0], approx=True)   # (B, 1)

        # ---- final linear (one-time, off the critical path -> kept in f32 for accuracy) ----
        h_f_last = h_last[:, :H]                            # h_fwd(T-1)
        h_b_last = hist_b[T - 1][:, H:]                     # h_bwd(T-1)
        fc_att = (jnp.dot(h_f_last, fcw_af_ref[...], preferred_element_type=jnp.float32)
                  + jnp.dot(h_b_last, fcw_ab_ref[...], preferred_element_type=jnp.float32))
        out_ref[...] = (alpha_last * fc_att
                        + jnp.dot(emb_ref[T - 1], fcw_e_ref[...],
                                  preferred_element_type=jnp.float32)
                        + fcb_ref[...])

    return kernel


def _gate_cols(w, H, fwd):
    """(4H, D) PyTorch-layout weight -> (D, 8H) whose columns are gate-interleaved
    [i_f i_b f_f f_b g_f g_b o_f o_b] (each block H wide); only the fwd (or bwd)
    blocks are populated, the other direction's blocks are zero."""
    D = w.shape[1]
    wt = w.T.reshape(D, 4, 1, H)
    z = jnp.zeros_like(wt)
    parts = [wt, z] if fwd else [z, wt]
    return jnp.concatenate(parts, axis=2).reshape(D, 8 * H)


def _gate_interleave_bias(b_f, b_b, H):
    return jnp.concatenate(
        [b_f.reshape(4, 1, H), b_b.reshape(4, 1, H)], axis=1).reshape(1, 8 * H)


def discriminator_forward(emb, params, h0, c0, *, H, C):
    """emb: (B, T, E) float32 (batch-first, like the PyTorch module). Requires E == H
    (the module's fc expects 3*H features = 2*H attention + E embedding)."""
    B, T, E = emb.shape
    assert E == H, "Discriminator requires embedding_dim == dis_rnn_hidden_size"

    emb_tm = jnp.transpose(emb, (1, 0, 2))                            # (T, B, E)

    w_in_f = _gate_cols(params["wih_f"], H, fwd=True).astype(jnp.bfloat16)   # (E, 8H)
    w_in_b = _gate_cols(params["wih_b"], H, fwd=False).astype(jnp.bfloat16)  # (E, 8H)
    w_hh = jnp.concatenate(
        [_gate_cols(params["whh_f"], H, fwd=True),
         _gate_cols(params["whh_b"], H, fwd=False)], axis=0).astype(jnp.bfloat16)  # (2H, 8H)
    b = _gate_interleave_bias(params["b_f"], params["b_b"], H)        # (1, 8H)

    h0_cat = jnp.concatenate([h0[0], h0[1]], axis=-1)                 # (B, 2H)
    c0_cat = jnp.concatenate([c0[0], c0[1]], axis=-1)                 # (B, 2H)

    fcw = params["fc_w"].T                                            # (3H, C)
    inputs = [
        emb_tm, w_in_f, w_in_b, w_hh, b, h0_cat, c0_cat,
        params["att_w"].reshape(1, -1),                               # (1, 2H)
        fcw[:H], fcw[H:2 * H], fcw[2 * H:],                           # (H,C), (H,C), (E,C)
        params["fc_b"].reshape(1, -1),                                # (1, C)
    ]

    kernel = _make_kernel(T, B, E, H, C)
    return pl.pallas_call(
        kernel,
        out_shape=jax.ShapeDtypeStruct((B, C), jnp.float32),
        in_specs=[pl.BlockSpec(memory_space=pltpu.MemorySpace.VMEM)] * len(inputs),
        out_specs=pl.BlockSpec(memory_space=pltpu.MemorySpace.VMEM),
        scratch_shapes=[
            pltpu.VMEM((T, B, 8 * H), jnp.float32),    # hoisted input projection
            pltpu.VMEM((T, B, 2 * H), jnp.float32),    # history, fwd time index
            pltpu.VMEM((T, B, 2 * H), jnp.float32),    # history, bwd time index
        ],
        # explicit VMEM budget (everything is whole-array resident at these toy shapes)
        compiler_params=pltpu.CompilerParams(vmem_limit_bytes=32 * 1024 * 1024),
    )(*inputs)


def reference_forward(emb, params, h0, c0):
    """Pure-JAX reference (matches PyTorch semantics) for validation."""
    def cell(wih, whh, b):
        def step(carry, x_t):
            h, c = carry
            gates = x_t @ wih.T + h @ whh.T + b
            i, f, g, o = jnp.split(gates, 4, axis=-1)
            c = jax.nn.sigmoid(f) * c + jax.nn.sigmoid(i) * jnp.tanh(g)
            h = jax.nn.sigmoid(o) * jnp.tanh(c)
            return (h, c), h
        return step

    xs = jnp.transpose(emb, (1, 0, 2))                                # (T, B, E)
    _, hs_f = lax.scan(cell(params["wih_f"], params["whh_f"], params["b_f"]),
                       (h0[0], c0[0]), xs)
    _, hs_b = lax.scan(cell(params["wih_b"], params["whh_b"], params["b_b"]),
                       (h0[1], c0[1]), xs[::-1])
    hs_b = hs_b[::-1]
    lstm_out = jnp.transpose(jnp.concatenate([hs_f, hs_b], axis=-1), (1, 0, 2))  # (B, T, 2H)

    M = jnp.tanh(lstm_out)
    alpha = jax.nn.softmax(M @ params["att_w"], axis=1)[..., None]    # softmax over time
    att_out = lstm_out * alpha
    cat = jnp.concatenate([att_out, emb], axis=-1)
    last = cat[:, -1, :]
    return last @ params["fc_w"].T + params["fc_b"]


if __name__ == "__main__":
    # Small config consistent with the module: embedding_dim == dis_rnn_hidden_size,
    # 1 LSTM layer, 2 classes.
    B, T, E, H, C = 2, 8, 16, 16, 2

    key = jax.random.PRNGKey(0)
    keys = jax.random.split(key, 12)

    params = {
        "wih_f": 0.1 * jax.random.normal(keys[0], (4 * H, E), jnp.float32),
        "whh_f": 0.1 * jax.random.normal(keys[1], (4 * H, H), jnp.float32),
        "b_f":   0.1 * jax.random.normal(keys[2], (4 * H,), jnp.float32),   # b_ih + b_hh merged
        "wih_b": 0.1 * jax.random.normal(keys[3], (4 * H, E), jnp.float32),
        "whh_b": 0.1 * jax.random.normal(keys[4], (4 * H, H), jnp.float32),
        "b_b":   0.1 * jax.random.normal(keys[5], (4 * H,), jnp.float32),
        "att_w": 0.05 * jax.random.normal(keys[6], (2 * H,), jnp.float32),  # Attention.w ~ N(0, 0.05)
        "fc_w":  0.1 * jax.random.normal(keys[7], (C, 3 * H), jnp.float32),
        "fc_b":  0.1 * jax.random.normal(keys[8], (C,), jnp.float32),
    }

    emb = jax.random.normal(keys[9], (B, T, E), jnp.float32)
    # The PyTorch module draws h0/c0 with torch.randn when state is None; here they
    # are deterministic draws passed in explicitly.
    h0 = jax.random.normal(keys[10], (2, B, H), jnp.float32)
    c0 = jax.random.normal(keys[11], (2, B, H), jnp.float32)

    out = jax.block_until_ready(discriminator_forward(emb, params, h0, c0, H=H, C=C))

    with jax.default_matmul_precision("float32"):
        ref = jax.block_until_ready(reference_forward(emb, params, h0, c0))

    max_err = float(jnp.max(jnp.abs(out - ref)))
    assert out.shape == (B, C), out.shape
    # Tolerance accounts for the bf16 operands of the projection / recurrent MXU dots
    # (single-pass MXU per perf review) accumulated over the T-step recurrence, plus the
    # approx reciprocal in the softmax; the f32 reference is exact.
    assert max_err < 5e-3, f"kernel/reference mismatch, max abs err = {max_err}"

    # TODO(synk): dis=True branch (frozen pretrained embedding lookup + sigmoid) is not
    # exercised; the default dis=False forward path is what is implemented.
    print("KERNEL_OK")
</pallas_src>

<mosaic_0001>
module attributes {stable_mosaic.version = 11 : i64} {
  func.func @kernel(%arg0: memref<8x2x16xf32, #tpu.memory_space<vmem>>, %arg1: memref<16x128xbf16, #tpu.memory_space<vmem>>, %arg2: memref<16x128xbf16, #tpu.memory_space<vmem>>, %arg3: memref<32x128xbf16, #tpu.memory_space<vmem>>, %arg4: memref<1x128xf32, #tpu.memory_space<vmem>>, %arg5: memref<2x32xf32, #tpu.memory_space<vmem>>, %arg6: memref<2x32xf32, #tpu.memory_space<vmem>>, %arg7: memref<1x32xf32, #tpu.memory_space<vmem>>, %arg8: memref<16x2xf32, #tpu.memory_space<vmem>>, %arg9: memref<16x2xf32, #tpu.memory_space<vmem>>, %arg10: memref<16x2xf32, #tpu.memory_space<vmem>>, %arg11: memref<1x2xf32, #tpu.memory_space<vmem>>, %arg12: memref<2x2xf32, #tpu.memory_space<vmem>>, %arg13: memref<8x2x128xf32, #tpu.memory_space<vmem>>, %arg14: memref<8x2x32xf32, #tpu.memory_space<vmem>>, %arg15: memref<8x2x32xf32, #tpu.memory_space<vmem>>) attributes {dimension_semantics = [], scalar_prefetch = 0 : i64, scratch_operands = 3 : i64, tpu.core_type = #tpu.core_type<tc>} {
    %c0 = arith.constant 0 : index
    %c0_0 = arith.constant 0 : index
    %0 = vector.load %arg1[%c0, %c0_0] : memref<16x128xbf16, #tpu.memory_space<vmem>>, vector<16x128xbf16>
    %c0_1 = arith.constant 0 : index
    %c0_2 = arith.constant 0 : index
    %1 = vector.load %arg2[%c0_1, %c0_2] : memref<16x128xbf16, #tpu.memory_space<vmem>>, vector<16x128xbf16>
    %c0_3 = arith.constant 0 : index
    %c0_4 = arith.constant 0 : index
    %2 = vector.load %arg4[%c0_3, %c0_4] : memref<1x128xf32, #tpu.memory_space<vmem>>, vector<1x128xf32>
    %c0_5 = arith.constant 0 : index
    %c0_6 = arith.constant 0 : index
    %c0_7 = arith.constant 0 : index
    %3 = vector.load %arg0[%c0_5, %c0_6, %c0_7] : memref<8x2x16xf32, #tpu.memory_space<vmem>>, vector<1x2x16xf32>
    %4 = vector.shape_cast %3 : vector<1x2x16xf32> to vector<2x16xf32>
    %5 = arith.truncf %4 : vector<2x16xf32> to vector<2x16xbf16>
    %c7 = arith.constant 7 : index
    %c0_8 = arith.constant 0 : index
    %c0_9 = arith.constant 0 : index
    %6 = vector.load %arg0[%c7, %c0_8, %c0_9] : memref<8x2x16xf32, #tpu.memory_space<vmem>>, vector<1x2x16xf32>
    %7 = vector.shape_cast %6 : vector<1x2x16xf32> to vector<2x16xf32>
    %8 = arith.truncf %7 : vector<2x16xf32> to vector<2x16xbf16>
    %cst = arith.constant dense<0.000000e+00> : vector<2x128xf32>
    %9 = tpu.matmul %5, %0, %cst {dimension_numbers = #tpu.dot_dimension_numbers<[1], [0], [0], [1], [0, 0, 1, 1], [], []>} : vector<2x16xbf16>, vector<16x128xbf16>, vector<2x128xf32> -> vector<2x128xf32>
    %cst_10 = arith.constant dense<0.000000e+00> : vector<2x128xf32>
    %10 = tpu.matmul %8, %1, %cst_10 {dimension_numbers = #tpu.dot_dimension_numbers<[1], [0], [0], [1], [0, 0, 1, 1], [], []>} : vector<2x16xbf16>, vector<16x128xbf16>, vector<2x128xf32> -> vector<2x128xf32>
    %11 = arith.addf %9, %10 : vector<2x128xf32>
    %12 = vector.broadcast %2 : vector<1x128xf32> to vector<2x128xf32>
    %13 = arith.addf %11, %12 : vector<2x128xf32>
    %c0_11 = arith.constant 0 : index
    %c0_12 = arith.constant 0 : index
    %c0_13 = arith.constant 0 : index
    %14 = vector.load %arg13[%c0_11, %c0_12, %c0_13] : memref<8x2x128xf32, #tpu.memory_space<vmem>>, vector<1x2x128xf32>
    %15 = vector.shape_cast %14 : vector<1x2x128xf32> to vector<2x128xf32>
    %16 = vector.shape_cast %13 : vector<2x128xf32> to vector<1x2x128xf32>
    tpu.vector_store %arg13[%c0_11, %c0_12, %c0_13], %16 {strides = array<i32>} : memref<8x2x128xf32, #tpu.memory_space<vmem>>, vector<1x2x128xf32>,
    %c1 = arith.constant 1 : index
    %c0_14 = arith.constant 0 : index
    %c0_15 = arith.constant 0 : index
    %17 = vector.load %arg0[%c1, %c0_14, %c0_15] : memref<8x2x16xf32, #tpu.memory_space<vmem>>, vector<1x2x16xf32>
    %18 = vector.shape_cast %17 : vector<1x2x16xf32> to vector<2x16xf32>
    %19 = arith.truncf %18 : vector<2x16xf32> to vector<2x16xbf16>
    %c6 = arith.constant 6 : index
    %c0_16 = arith.constant 0 : index
    %c0_17 = arith.constant 0 : index
    %20 = vector.load %arg0[%c6, %c0_16, %c0_17] : memref<8x2x16xf32, #tpu.memory_space<vmem>>, vector<1x2x16xf32>
    %21 = vector.shape_cast %20 : vector<1x2x16xf32> to vector<2x16xf32>
    %22 = arith.truncf %21 : vector<2x16xf32> to vector<2x16xbf16>
    %cst_18 = arith.constant dense<0.000000e+00> : vector<2x128xf32>
    %23 = tpu.matmul %19, %0, %cst_18 {dimension_numbers = #tpu.dot_dimension_numbers<[1], [0], [0], [1], [0, 0, 1, 1], [], []>} : vector<2x16xbf16>, vector<16x128xbf16>, vector<2x128xf32> -> vector<2x128xf32>
    %cst_19 = arith.constant dense<0.000000e+00> : vector<2x128xf32>
    %24 = tpu.matmul %22, %1, %cst_19 {dimension_numbers = #tpu.dot_dimension_numbers<[1], [0], [0], [1], [0, 0, 1, 1], [], []>} : vector<2x16xbf16>, vector<16x128xbf16>, vector<2x128xf32> -> vector<2x128xf32>
    %25 = arith.addf %23, %24 : vector<2x128xf32>
    %26 = vector.broadcast %2 : vector<1x128xf32> to vector<2x128xf32>
    %27 = arith.addf %25, %26 : vector<2x128xf32>
    %c1_20 = arith.constant 1 : index
    %c0_21 = arith.constant 0 : index
    %c0_22 = arith.constant 0 : index
    %28 = vector.load %arg13[%c1_20, %c0_21, %c0_22] : memref<8x2x128xf32, #tpu.memory_space<vmem>>, vector<1x2x128xf32>
    %29 = vector.shape_cast %28 : vector<1x2x128xf32> to vector<2x128xf32>
    %30 = vector.shape_cast %27 : vector<2x128xf32> to vector<1x2x128xf32>
    tpu.vector_store %arg13[%c1_20, %c0_21, %c0_22], %30 {strides = array<i32>} : memref<8x2x128xf32, #tpu.memory_space<vmem>>, vector<1x2x128xf32>,
    %c2 = arith.constant 2 : index
    %c0_23 = arith.constant 0 : index
    %c0_24 = arith.constant 0 : index
    %31 = vector.load %arg0[%c2, %c0_23, %c0_24] : memref<8x2x16xf32, #tpu.memory_space<vmem>>, vector<1x2x16xf32>
    %32 = vector.shape_cast %31 : vector<1x2x16xf32> to vector<2x16xf32>
    %33 = arith.truncf %32 : vector<2x16xf32> to vector<2x16xbf16>
    %c5 = arith.constant 5 : index
    %c0_25 = arith.constant 0 : index
    %c0_26 = arith.constant 0 : index
    %34 = vector.load %arg0[%c5, %c0_25, %c0_26] : memref<8x2x16xf32, #tpu.memory_space<vmem>>, vector<1x2x16xf32>
    %35 = vector.shape_cast %34 : vector<1x2x16xf32> to vector<2x16xf32>
    %36 = arith.truncf %35 : vector<2x16xf32> to vector<2x16xbf16>
    %cst_27 = arith.constant dense<0.000000e+00> : vector<2x128xf32>
    %37 = tpu.matmul %33, %0, %cst_27 {dimension_numbers = #tpu.dot_dimension_numbers<[1], [0], [0], [1], [0, 0, 1, 1], [], []>} : vector<2x16xbf16>, vector<16x128xbf16>, vector<2x128xf32> -> vector<2x128xf32>
    %cst_28 = arith.constant dense<0.000000e+00> : vector<2x128xf32>
    %38 = tpu.matmul %36, %1, %cst_28 {dimension_numbers = #tpu.dot_dimension_numbers<[1], [0], [0], [1], [0, 0, 1, 1], [], []>} : vector<2x16xbf16>, vector<16x128xbf16>, vector<2x128xf32> -> vector<2x128xf32>
    %39 = arith.addf %37, %38 : vector<2x128xf32>
    %40 = vector.broadcast %2 : vector<1x128xf32> to vector<2x128xf32>
    %41 = arith.addf %39, %40 : vector<2x128xf32>
    %c2_29 = arith.constant 2 : index
    %c0_30 = arith.constant 0 : index
    %c0_31 = arith.constant 0 : index
    %42 = vector.load %arg13[%c2_29, %c0_30, %c0_31] : memref<8x2x128xf32, #tpu.memory_space<vmem>>, vector<1x2x128xf32>
    %43 = vector.shape_cast %42 : vector<1x2x128xf32> to vector<2x128xf32>
    %44 = vector.shape_cast %41 : vector<2x128xf32> to vector<1x2x128xf32>
    tpu.vector_store %arg13[%c2_29, %c0_30, %c0_31], %44 {strides = array<i32>} : memref<8x2x128xf32, #tpu.memory_space<vmem>>, vector<1x2x128xf32>,
    %c3 = arith.constant 3 : index
    %c0_32 = arith.constant 0 : index
    %c0_33 = arith.constant 0 : index
    %45 = vector.load %arg0[%c3, %c0_32, %c0_33] : memref<8x2x16xf32, #tpu.memory_space<vmem>>, vector<1x2x16xf32>
    %46 = vector.shape_cast %45 : vector<1x2x16xf32> to vector<2x16xf32>
    %47 = arith.truncf %46 : vector<2x16xf32> to vector<2x16xbf16>
    %c4 = arith.constant 4 : index
    %c0_34 = arith.constant 0 : index
    %c0_35 = arith.constant 0 : index
    %48 = vector.load %arg0[%c4, %c0_34, %c0_35] : memref<8x2x16xf32, #tpu.memory_space<vmem>>, vector<1x2x16xf32>
    %49 = vector.shape_cast %48 : vector<1x2x16xf32> to vector<2x16xf32>
    %50 = arith.truncf %49 : vector<2x16xf32> to vector<2x16xbf16>
    %cst_36 = arith.constant dense<0.000000e+00> : vector<2x128xf32>
    %51 = tpu.matmul %47, %0, %cst_36 {dimension_numbers = #tpu.dot_dimension_numbers<[1], [0], [0], [1], [0, 0, 1, 1], [], []>} : vector<2x16xbf16>, vector<16x128xbf16>, vector<2x128xf32> -> vector<2x128xf32>
    %cst_37 = arith.constant dense<0.000000e+00> : vector<2x128xf32>
    %52 = tpu.matmul %50, %1, %cst_37 {dimension_numbers = #tpu.dot_dimension_numbers<[1], [0], [0], [1], [0, 0, 1, 1], [], []>} : vector<2x16xbf16>, vector<16x128xbf16>, vector<2x128xf32> -> vector<2x128xf32>
    %53 = arith.addf %51, %52 : vector<2x128xf32>
    %54 = vector.broadcast %2 : vector<1x128xf32> to vector<2x128xf32>
    %55 = arith.addf %53, %54 : vector<2x128xf32>
    %c3_38 = arith.constant 3 : index
    %c0_39 = arith.constant 0 : index
    %c0_40 = arith.constant 0 : index
    %56 = vector.load %arg13[%c3_38, %c0_39, %c0_40] : memref<8x2x128xf32, #tpu.memory_space<vmem>>, vector<1x2x128xf32>
    %57 = vector.shape_cast %56 : vector<1x2x128xf32> to vector<2x128xf32>
    %58 = vector.shape_cast %55 : vector<2x128xf32> to vector<1x2x128xf32>
    tpu.vector_store %arg13[%c3_38, %c0_39, %c0_40], %58 {strides = array<i32>} : memref<8x2x128xf32, #tpu.memory_space<vmem>>, vector<1x2x128xf32>,
    %c4_41 = arith.constant 4 : index
    %c0_42 = arith.constant 0 : index
    %c0_43 = arith.constant 0 : index
    %59 = vector.load %arg0[%c4_41, %c0_42, %c0_43] : memref<8x2x16xf32, #tpu.memory_space<vmem>>, vector<1x2x16xf32>
    %60 = vector.shape_cast %59 : vector<1x2x16xf32> to vector<2x16xf32>
    %61 = arith.truncf %60 : vector<2x16xf32> to vector<2x16xbf16>
    %c3_44 = arith.constant 3 : index
    %c0_45 = arith.constant 0 : index
    %c0_46 = arith.constant 0 : index
    %62 = vector.load %arg0[%c3_44, %c0_45, %c0_46] : memref<8x2x16xf32, #tpu.memory_space<vmem>>, vector<1x2x16xf32>
    %63 = vector.shape_cast %62 : vector<1x2x16xf32> to vector<2x16xf32>
    %64 = arith.truncf %63 : vector<2x16xf32> to vector<2x16xbf16>
    %cst_47 = arith.constant dense<0.000000e+00> : vector<2x128xf32>
    %65 = tpu.matmul %61, %0, %cst_47 {dimension_numbers = #tpu.dot_dimension_numbers<[1], [0], [0], [1], [0, 0, 1, 1], [], []>} : vector<2x16xbf16>, vector<16x128xbf16>, vector<2x128xf32> -> vector<2x128xf32>
    %cst_48 = arith.constant dense<0.000000e+00> : vector<2x128xf32>
    %66 = tpu.matmul %64, %1, %cst_48 {dimension_numbers = #tpu.dot_dimension_numbers<[1], [0], [0], [1], [0, 0, 1, 1], [], []>} : vector<2x16xbf16>, vector<16x128xbf16>, vector<2x128xf32> -> vector<2x128xf32>
    %67 = arith.addf %65, %66 : vector<2x128xf32>
    %68 = vector.broadcast %2 : vector<1x128xf32> to vector<2x128xf32>
    %69 = arith.addf %67, %68 : vector<2x128xf32>
    %c4_49 = arith.constant 4 : index
    %c0_50 = arith.constant 0 : index
    %c0_51 = arith.constant 0 : index
    %70 = vector.load %arg13[%c4_49, %c0_50, %c0_51] : memref<8x2x128xf32, #tpu.memory_space<vmem>>, vector<1x2x128xf32>
    %71 = vector.shape_cast %70 : vector<1x2x128xf32> to vector<2x128xf32>
    %72 = vector.shape_cast %69 : vector<2x128xf32> to vector<1x2x128xf32>
    tpu.vector_store %arg13[%c4_49, %c0_50, %c0_51], %72 {strides = array<i32>} : memref<8x2x128xf32, #tpu.memory_space<vmem>>, vector<1x2x128xf32>,
    %c5_52 = arith.constant 5 : index
    %c0_53 = arith.constant 0 : index
    %c0_54 = arith.constant 0 : index
    %73 = vector.load %arg0[%c5_52, %c0_53, %c0_54] : memref<8x2x16xf32, #tpu.memory_space<vmem>>, vector<1x2x16xf32>
    %74 = vector.shape_cast %73 : vector<1x2x16xf32> to vector<2x16xf32>
    %75 = arith.truncf %74 : vector<2x16xf32> to vector<2x16xbf16>
    %c2_55 = arith.constant 2 : index
    %c0_56 = arith.constant 0 : index
    %c0_57 = arith.constant 0 : index
    %76 = vector.load %arg0[%c2_55, %c0_56, %c0_57] : memref<8x2x16xf32, #tpu.memory_space<vmem>>, vector<1x2x16xf32>
    %77 = vector.shape_cast %76 : vector<1x2x16xf32> to vector<2x16xf32>
    %78 = arith.truncf %77 : vector<2x16xf32> to vector<2x16xbf16>
    %cst_58 = arith.constant dense<0.000000e+00> : vector<2x128xf32>
    %79 = tpu.matmul %75, %0, %cst_58 {dimension_numbers = #tpu.dot_dimension_numbers<[1], [0], [0], [1], [0, 0, 1, 1], [], []>} : vector<2x16xbf16>, vector<16x128xbf16>, vector<2x128xf32> -> vector<2x128xf32>
    %cst_59 = arith.constant dense<0.000000e+00> : vector<2x128xf32>
    %80 = tpu.matmul %78, %1, %cst_59 {dimension_numbers = #tpu.dot_dimension_numbers<[1], [0], [0], [1], [0, 0, 1, 1], [], []>} : vector<2x16xbf16>, vector<16x128xbf16>, vector<2x128xf32> -> vector<2x128xf32>
    %81 = arith.addf %79, %80 : vector<2x128xf32>
    %82 = vector.broadcast %2 : vector<1x128xf32> to vector<2x128xf32>
    %83 = arith.addf %81, %82 : vector<2x128xf32>
    %c5_60 = arith.constant 5 : index
    %c0_61 = arith.constant 0 : index
    %c0_62 = arith.constant 0 : index
    %84 = vector.load %arg13[%c5_60, %c0_61, %c0_62] : memref<8x2x128xf32, #tpu.memory_space<vmem>>, vector<1x2x128xf32>
    %85 = vector.shape_cast %84 : vector<1x2x128xf32> to vector<2x128xf32>
    %86 = vector.shape_cast %83 : vector<2x128xf32> to vector<1x2x128xf32>
    tpu.vector_store %arg13[%c5_60, %c0_61, %c0_62], %86 {strides = array<i32>} : memref<8x2x128xf32, #tpu.memory_space<vmem>>, vector<1x2x128xf32>,
    %c6_63 = arith.constant 6 : index
    %c0_64 = arith.constant 0 : index
    %c0_65 = arith.constant 0 : index
    %87 = vector.load %arg0[%c6_63, %c0_64, %c0_65] : memref<8x2x16xf32, #tpu.memory_space<vmem>>, vector<1x2x16xf32>
    %88 = vector.shape_cast %87 : vector<1x2x16xf32> to vector<2x16xf32>
    %89 = arith.truncf %88 : vector<2x16xf32> to vector<2x16xbf16>
    %c1_66 = arith.constant 1 : index
    %c0_67 = arith.constant 0 : index
    %c0_68 = arith.constant 0 : index
    %90 = vector.load %arg0[%c1_66, %c0_67, %c0_68] : memref<8x2x16xf32, #tpu.memory_space<vmem>>, vector<1x2x16xf32>
    %91 = vector.shape_cast %90 : vector<1x2x16xf32> to vector<2x16xf32>
    %92 = arith.truncf %91 : vector<2x16xf32> to vector<2x16xbf16>
    %cst_69 = arith.constant dense<0.000000e+00> : vector<2x128xf32>
    %93 = tpu.matmul %89, %0, %cst_69 {dimension_numbers = #tpu.dot_dimension_numbers<[1], [0], [0], [1], [0, 0, 1, 1], [], []>} : vector<2x16xbf16>, vector<16x128xbf16>, vector<2x128xf32> -> vector<2x128xf32>
    %cst_70 = arith.constant dense<0.000000e+00> : vector<2x128xf32>
    %94 = tpu.matmul %92, %1, %cst_70 {dimension_numbers = #tpu.dot_dimension_numbers<[1], [0], [0], [1], [0, 0, 1, 1], [], []>} : vector<2x16xbf16>, vector<16x128xbf16>, vector<2x128xf32> -> vector<2x128xf32>
    %95 = arith.addf %93, %94 : vector<2x128xf32>
    %96 = vector.broadcast %2 : vector<1x128xf32> to vector<2x128xf32>
    %97 = arith.addf %95, %96 : vector<2x128xf32>
    %c6_71 = arith.constant 6 : index
    %c0_72 = arith.constant 0 : index
    %c0_73 = arith.constant 0 : index
    %98 = vector.load %arg13[%c6_71, %c0_72, %c0_73] : memref<8x2x128xf32, #tpu.memory_space<vmem>>, vector<1x2x128xf32>
    %99 = vector.shape_cast %98 : vector<1x2x128xf32> to vector<2x128xf32>
    %100 = vector.shape_cast %97 : vector<2x128xf32> to vector<1x2x128xf32>
    tpu.vector_store %arg13[%c6_71, %c0_72, %c0_73], %100 {strides = array<i32>} : memref<8x2x128xf32, #tpu.memory_space<vmem>>, vector<1x2x128xf32>,
    %c7_74 = arith.constant 7 : index
    %c0_75 = arith.constant 0 : index
    %c0_76 = arith.constant 0 : index
    %101 = vector.load %arg0[%c7_74, %c0_75, %c0_76] : memref<8x2x16xf32, #tpu.memory_space<vmem>>, vector<1x2x16xf32>
    %102 = vector.shape_cast %101 : vector<1x2x16xf32> to vector<2x16xf32>
    %103 = arith.truncf %102 : vector<2x16xf32> to vector<2x16xbf16>
    %c0_77 = arith.constant 0 : index
    %c0_78 = arith.constant 0 : index
    %c0_79 = arith.constant 0 : index
    %104 = vector.load %arg0[%c0_77, %c0_78, %c0_79] : memref<8x2x16xf32, #tpu.memory_space<vmem>>, vector<1x2x16xf32>
    %105 = vector.shape_cast %104 : vector<1x2x16xf32> to vector<2x16xf32>
    %106 = arith.truncf %105 : vector<2x16xf32> to vector<2x16xbf16>
    %cst_80 = arith.constant dense<0.000000e+00> : vector<2x128xf32>
    %107 = tpu.matmul %103, %0, %cst_80 {dimension_numbers = #tpu.dot_dimension_numbers<[1], [0], [0], [1], [0, 0, 1, 1], [], []>} : vector<2x16xbf16>, vector<16x128xbf16>, vector<2x128xf32> -> vector<2x128xf32>
    %cst_81 = arith.constant dense<0.000000e+00> : vector<2x128xf32>
    %108 = tpu.matmul %106, %1, %cst_81 {dimension_numbers = #tpu.dot_dimension_numbers<[1], [0], [0], [1], [0, 0, 1, 1], [], []>} : vector<2x16xbf16>, vector<16x128xbf16>, vector<2x128xf32> -> vector<2x128xf32>
    %109 = arith.addf %107, %108 : vector<2x128xf32>
    %110 = vector.broadcast %2 : vector<1x128xf32> to vector<2x128xf32>
    %111 = arith.addf %109, %110 : vector<2x128xf32>
    %c7_82 = arith.constant 7 : index
    %c0_83 = arith.constant 0 : index
    %c0_84 = arith.constant 0 : index
    %112 = vector.load %arg13[%c7_82, %c0_83, %c0_84] : memref<8x2x128xf32, #tpu.memory_space<vmem>>, vector<1x2x128xf32>
    %113 = vector.shape_cast %112 : vector<1x2x128xf32> to vector<2x128xf32>
    %114 = vector.shape_cast %111 : vector<2x128xf32> to vector<1x2x128xf32>
    tpu.vector_store %arg13[%c7_82, %c0_83, %c0_84], %114 {strides = array<i32>} : memref<8x2x128xf32, #tpu.memory_space<vmem>>, vector<1x2x128xf32>,
    %c0_85 = arith.constant 0 : index
    %c0_86 = arith.constant 0 : index
    %115 = vector.load %arg3[%c0_85, %c0_86] : memref<32x128xbf16, #tpu.memory_space<vmem>>, vector<32x128xbf16>
    %c0_87 = arith.constant 0 : index
    %c0_88 = arith.constant 0 : index
    %116 = vector.load %arg5[%c0_87, %c0_88] : memref<2x32xf32, #tpu.memory_space<vmem>>, vector<2x32xf32>
    %c0_89 = arith.constant 0 : index
    %c0_90 = arith.constant 0 : index
    %117 = vector.load %arg6[%c0_89, %c0_90] : memref<2x32xf32, #tpu.memory_space<vmem>>, vector<2x32xf32>
    %c0_i32 = arith.constant 0 : i32
    %118 = arith.index_cast %c0_i32 : i32 to index
    %c0_91 = arith.constant 0 : index
    %c0_92 = arith.constant 0 : index
    %119 = vector.load %arg13[%118, %c0_91, %c0_92] : memref<8x2x128xf32, #tpu.memory_space<vmem>>, vector<1x2x128xf32>
    %120 = vector.shape_cast %119 : vector<1x2x128xf32> to vector<2x128xf32>
    %121 = arith.truncf %116 : vector<2x32xf32> to vector<2x32xbf16>
    %cst_93 = arith.constant dense<0.000000e+00> : vector<2x128xf32>
    %122 = tpu.matmul %121, %115, %cst_93 {dimension_numbers = #tpu.dot_dimension_numbers<[1], [0], [0], [1], [0, 0, 1, 1], [], []>} : vector<2x32xbf16>, vector<32x128xbf16>, vector<2x128xf32> -> vector<2x128xf32>
    %123 = arith.addf %120, %122 : vector<2x128xf32>
    %124 = arith.negf %123 : vector<2x128xf32>
    %125 = math.exp %124 : vector<2x128xf32>
    %cst_94 = arith.constant 1.000000e+00 : f32
    %126 = vector.broadcast %cst_94 : f32 to vector<2x128xf32>
    %127 = arith.addf %126, %125 : vector<2x128xf32>
    %128 = arith.divf %126, %127 : vector<2x128xf32>
    %129 = vector.extract_strided_slice %128 {offsets = [0, 0], sizes = [2, 32], strides = [1, 1]} : vector<2x128xf32> to vector<2x32xf32>
    %130 = vector.extract_strided_slice %128 {offsets = [0, 32], sizes = [2, 32], strides = [1, 1]} : vector<2x128xf32> to vector<2x32xf32>
    %131 = vector.extract_strided_slice %128 {offsets = [0, 96], sizes = [2, 32], strides = [1, 1]} : vector<2x128xf32> to vector<2x32xf32>
    %132 = vector.extract_strided_slice %123 {offsets = [0, 64], sizes = [2, 32], strides = [1, 1]} : vector<2x128xf32> to vector<2x32xf32>
    %133 = math.tanh %132 : vector<2x32xf32>
    %134 = arith.mulf %130, %117 : vector<2x32xf32>
    %135 = arith.mulf %129, %133 : vector<2x32xf32>
    %136 = arith.addf %134, %135 : vector<2x32xf32>
    %137 = math.tanh %136 : vector<2x32xf32>
    %138 = arith.mulf %131, %137 : vector<2x32xf32>
    %139 = arith.index_cast %c0_i32 : i32 to index
    %c0_95 = arith.constant 0 : index
    %c0_96 = arith.constant 0 : index
    %140 = vector.load %arg14[%139, %c0_95, %c0_96] : memref<8x2x32xf32, #tpu.memory_space<vmem>>, vector<1x2x32xf32>
    %141 = vector.shape_cast %140 : vector<1x2x32xf32> to vector<2x32xf32>
    %142 = vector.shape_cast %138 : vector<2x32xf32> to vector<1x2x32xf32>
    tpu.vector_store %arg14[%139, %c0_95, %c0_96], %142 {strides = array<i32>} : memref<8x2x32xf32, #tpu.memory_space<vmem>>, vector<1x2x32xf32>,
    %c7_i32 = arith.constant 7 : i32
    %143 = arith.subi %c7_i32, %c0_i32 : i32
    %144 = arith.index_cast %143 : i32 to index
    %c0_97 = arith.constant 0 : index
    %c0_98 = arith.constant 0 : index
    %145 = vector.load %arg15[%144, %c0_97, %c0_98] : memref<8x2x32xf32, #tpu.memory_space<vmem>>, vector<1x2x32xf32>
    %146 = vector.shape_cast %145 : vector<1x2x32xf32> to vector<2x32xf32>
    %147 = vector.shape_cast %138 : vector<2x32xf32> to vector<1x2x32xf32>
    tpu.vector_store %arg15[%144, %c0_97, %c0_98], %147 {strides = array<i32>} : memref<8x2x32xf32, #tpu.memory_space<vmem>>, vector<1x2x32xf32>,
    %c1_i32 = arith.constant 1 : i32
    %148 = arith.index_cast %c1_i32 : i32 to index
    %c0_99 = arith.constant 0 : index
    %c0_100 = arith.constant 0 : index
    %149 = vector.load %arg13[%148, %c0_99, %c0_100] : memref<8x2x128xf32, #tpu.memory_space<vmem>>, vector<1x2x128xf32>
    %150 = vector.shape_cast %149 : vector<1x2x128xf32> to vector<2x128xf32>
    %151 = arith.truncf %138 : vector<2x32xf32> to vector<2x32xbf16>
    %cst_101 = arith.constant dense<0.000000e+00> : vector<2x128xf32>
    %152 = tpu.matmul %151, %115, %cst_101 {dimension_numbers = #tpu.dot_dimension_numbers<[1], [0], [0], [1], [0, 0, 1, 1], [], []>} : vector<2x32xbf16>, vector<32x128xbf16>, vector<2x128xf32> -> vector<2x128xf32>
    %153 = arith.addf %150, %152 : vector<2x128xf32>
    %154 = arith.negf %153 : vector<2x128xf32>
    %155 = math.exp %154 : vector<2x128xf32>
    %cst_102 = arith.constant 1.000000e+00 : f32
    %156 = vector.broadcast %cst_102 : f32 to vector<2x128xf32>
    %157 = arith.addf %156, %155 : vector<2x128xf32>
    %158 = arith.divf %156, %157 : vector<2x128xf32>
    %159 = vector.extract_strided_slice %158 {offsets = [0, 0], sizes = [2, 32], strides = [1, 1]} : vector<2x128xf32> to vector<2x32xf32>
    %160 = vector.extract_strided_slice %158 {offsets = [0, 32], sizes = [2, 32], strides = [1, 1]} : vector<2x128xf32> to vector<2x32xf32>
    %161 = vector.extract_strided_slice %158 {offsets = [0, 96], sizes = [2, 32], strides = [1, 1]} : vector<2x128xf32> to vector<2x32xf32>
    %162 = vector.extract_strided_slice %153 {offsets = [0, 64], sizes = [2, 32], strides = [1, 1]} : vector<2x128xf32> to vector<2x32xf32>
    %163 = math.tanh %162 : vector<2x32xf32>
    %164 = arith.mulf %160, %136 : vector<2x32xf32>
    %165 = arith.mulf %159, %163 : vector<2x32xf32>
    %166 = arith.addf %164, %165 : vector<2x32xf32>
    %167 = math.tanh %166 : vector<2x32xf32>
    %168 = arith.mulf %161, %167 : vector<2x32xf32>
    %169 = arith.index_cast %c1_i32 : i32 to index
    %c0_103 = arith.constant 0 : index
    %c0_104 = arith.constant 0 : index
    %170 = vector.load %arg14[%169, %c0_103, %c0_104] : memref<8x2x32xf32, #tpu.memory_space<vmem>>, vector<1x2x32xf32>
    %171 = vector.shape_cast %170 : vector<1x2x32xf32> to vector<2x32xf32>
    %172 = vector.shape_cast %168 : vector<2x32xf32> to vector<1x2x32xf32>
    tpu.vector_store %arg14[%169, %c0_103, %c0_104], %172 {strides = array<i32>} : memref<8x2x32xf32, #tpu.memory_space<vmem>>, vector<1x2x32xf32>,
    %c7_i32_105 = arith.constant 7 : i32
    %173 = arith.subi %c7_i32_105, %c1_i32 : i32
    %174 = arith.index_cast %173 : i32 to index
    %c0_106 = arith.constant 0 : index
    %c0_107 = arith.constant 0 : index
    %175 = vector.load %arg15[%174, %c0_106, %c0_107] : memref<8x2x32xf32, #tpu.memory_space<vmem>>, vector<1x2x32xf32>
    %176 = vector.shape_cast %175 : vector<1x2x32xf32> to vector<2x32xf32>
    %177 = vector.shape_cast %168 : vector<2x32xf32> to vector<1x2x32xf32>
    tpu.vector_store %arg15[%174, %c0_106, %c0_107], %177 {strides = array<i32>} : memref<8x2x32xf32, #tpu.memory_space<vmem>>, vector<1x2x32xf32>,
    %c2_i32 = arith.constant 2 : i32
    %178 = arith.index_cast %c2_i32 : i32 to index
    %c0_108 = arith.constant 0 : index
    %c0_109 = arith.constant 0 : index
    %179 = vector.load %arg13[%178, %c0_108, %c0_109] : memref<8x2x128xf32, #tpu.memory_space<vmem>>, vector<1x2x128xf32>
    %180 = vector.shape_cast %179 : vector<1x2x128xf32> to vector<2x128xf32>
    %181 = arith.truncf %168 : vector<2x32xf32> to vector<2x32xbf16>
    %cst_110 = arith.constant dense<0.000000e+00> : vector<2x128xf32>
    %182 = tpu.matmul %181, %115, %cst_110 {dimension_numbers = #tpu.dot_dimension_numbers<[1], [0], [0], [1], [0, 0, 1, 1], [], []>} : vector<2x32xbf16>, vector<32x128xbf16>, vector<2x128xf32> -> vector<2x128xf32>
    %183 = arith.addf %180, %182 : vector<2x128xf32>
    %184 = arith.negf %183 : vector<2x128xf32>
    %185 = math.exp %184 : vector<2x128xf32>
    %cst_111 = arith.constant 1.000000e+00 : f32
    %186 = vector.broadcast %cst_111 : f32 to vector<2x128xf32>
    %187 = arith.addf %186, %185 : vector<2x128xf32>
    %188 = arith.divf %186, %187 : vector<2x128xf32>
    %189 = vector.extract_strided_slice %188 {offsets = [0, 0], sizes = [2, 32], strides = [1, 1]} : vector<2x128xf32> to vector<2x32xf32>
    %190 = vector.extract_strided_slice %188 {offsets = [0, 32], sizes = [2, 32], strides = [1, 1]} : vector<2x128xf32> to vector<2x32xf32>
    %191 = vector.extract_strided_slice %188 {offsets = [0, 96], sizes = [2, 32], strides = [1, 1]} : vector<2x128xf32> to vector<2x32xf32>
    %192 = vector.extract_strided_slice %183 {offsets = [0, 64], sizes = [2, 32], strides = [1, 1]} : vector<2x128xf32> to vector<2x32xf32>
    %193 = math.tanh %192 : vector<2x32xf32>
    %194 = arith.mulf %190, %166 : vector<2x32xf32>
    %195 = arith.mulf %189, %193 : vector<2x32xf32>
    %196 = arith.addf %194, %195 : vector<2x32xf32>
    %197 = math.tanh %196 : vector<2x32xf32>
    %198 = arith.mulf %191, %197 : vector<2x32xf32>
    %199 = arith.index_cast %c2_i32 : i32 to index
    %c0_112 = arith.constant 0 : index
    %c0_113 = arith.constant 0 : index
    %200 = vector.load %arg14[%199, %c0_112, %c0_113] : memref<8x2x32xf32, #tpu.memory_space<vmem>>, vector<1x2x32xf32>
    %201 = vector.shape_cast %200 : vector<1x2x32xf32> to vector<2x32xf32>
    %202 = vector.shape_cast %198 : vector<2x32xf32> to vector<1x2x32xf32>
    tpu.vector_store %arg14[%199, %c0_112, %c0_113], %202 {strides = array<i32>} : memref<8x2x32xf32, #tpu.memory_space<vmem>>, vector<1x2x32xf32>,
    %c7_i32_114 = arith.constant 7 : i32
    %203 = arith.subi %c7_i32_114, %c2_i32 : i32
    %204 = arith.index_cast %203 : i32 to index
    %c0_115 = arith.constant 0 : index
    %c0_116 = arith.constant 0 : index
    %205 = vector.load %arg15[%204, %c0_115, %c0_116] : memref<8x2x32xf32, #tpu.memory_space<vmem>>, vector<1x2x32xf32>
    %206 = vector.shape_cast %205 : vector<1x2x32xf32> to vector<2x32xf32>
    %207 = vector.shape_cast %198 : vector<2x32xf32> to vector<1x2x32xf32>
    tpu.vector_store %arg15[%204, %c0_115, %c0_116], %207 {strides = array<i32>} : memref<8x2x32xf32, #tpu.memory_space<vmem>>, vector<1x2x32xf32>,
    %c3_i32 = arith.constant 3 : i32
    %208 = arith.index_cast %c3_i32 : i32 to index
    %c0_117 = arith.constant 0 : index
    %c0_118 = arith.constant 0 : index
    %209 = vector.load %arg13[%208, %c0_117, %c0_118] : memref<8x2x128xf32, #tpu.memory_space<vmem>>, vector<1x2x128xf32>
    %210 = vector.shape_cast %209 : vector<1x2x128xf32> to vector<2x128xf32>
    %211 = arith.truncf %198 : vector<2x32xf32> to vector<2x32xbf16>
    %cst_119 = arith.constant dense<0.000000e+00> : vector<2x128xf32>
    %212 = tpu.matmul %211, %115, %cst_119 {dimension_numbers = #tpu.dot_dimension_numbers<[1], [0], [0], [1], [0, 0, 1, 1], [], []>} : vector<2x32xbf16>, vector<32x128xbf16>, vector<2x128xf32> -> vector<2x128xf32>
    %213 = arith.addf %210, %212 : vector<2x128xf32>
    %214 = arith.negf %213 : vector<2x128xf32>
    %215 = math.exp %214 : vector<2x128xf32>
    %cst_120 = arith.constant 1.000000e+00 : f32
    %216 = vector.broadcast %cst_120 : f32 to vector<2x128xf32>
    %217 = arith.addf %216, %215 : vector<2x128xf32>
    %218 = arith.divf %216, %217 : vector<2x128xf32>
    %219 = vector.extract_strided_slice %218 {offsets = [0, 0], sizes = [2, 32], strides = [1, 1]} : vector<2x128xf32> to vector<2x32xf32>
    %220 = vector.extract_strided_slice %218 {offsets = [0, 32], sizes = [2, 32], strides = [1, 1]} : vector<2x128xf32> to vector<2x32xf32>
    %221 = vector.extract_strided_slice %218 {offsets = [0, 96], sizes = [2, 32], strides = [1, 1]} : vector<2x128xf32> to vector<2x32xf32>
    %222 = vector.extract_strided_slice %213 {offsets = [0, 64], sizes = [2, 32], strides = [1, 1]} : vector<2x128xf32> to vector<2x32xf32>
    %223 = math.tanh %222 : vector<2x32xf32>
    %224 = arith.mulf %220, %196 : vector<2x32xf32>
    %225 = arith.mulf %219, %223 : vector<2x32xf32>
    %226 = arith.addf %224, %225 : vector<2x32xf32>
    %227 = math.tanh %226 : vector<2x32xf32>
    %228 = arith.mulf %221, %227 : vector<2x32xf32>
    %229 = arith.index_cast %c3_i32 : i32 to index
    %c0_121 = arith.constant 0 : index
    %c0_122 = arith.constant 0 : index
    %230 = vector.load %arg14[%229, %c0_121, %c0_122] : memref<8x2x32xf32, #tpu.memory_space<vmem>>, vector<1x2x32xf32>
    %231 = vector.shape_cast %230 : vector<1x2x32xf32> to vector<2x32xf32>
    %232 = vector.shape_cast %228 : vector<2x32xf32> to vector<1x2x32xf32>
    tpu.vector_store %arg14[%229, %c0_121, %c0_122], %232 {strides = array<i32>} : memref<8x2x32xf32, #tpu.memory_space<vmem>>, vector<1x2x32xf32>,
    %c7_i32_123 = arith.constant 7 : i32
    %233 = arith.subi %c7_i32_123, %c3_i32 : i32
    %234 = arith.index_cast %233 : i32 to index
    %c0_124 = arith.constant 0 : index
    %c0_125 = arith.constant 0 : index
    %235 = vector.load %arg15[%234, %c0_124, %c0_125] : memref<8x2x32xf32, #tpu.memory_space<vmem>>, vector<1x2x32xf32>
    %236 = vector.shape_cast %235 : vector<1x2x32xf32> to vector<2x32xf32>
    %237 = vector.shape_cast %228 : vector<2x32xf32> to vector<1x2x32xf32>
    tpu.vector_store %arg15[%234, %c0_124, %c0_125], %237 {strides = array<i32>} : memref<8x2x32xf32, #tpu.memory_space<vmem>>, vector<1x2x32xf32>,
    %c4_i32 = arith.constant 4 : i32
    %238 = arith.index_cast %c4_i32 : i32 to index
    %c0_126 = arith.constant 0 : index
    %c0_127 = arith.constant 0 : index
    %239 = vector.load %arg13[%238, %c0_126, %c0_127] : memref<8x2x128xf32, #tpu.memory_space<vmem>>, vector<1x2x128xf32>
    %240 = vector.shape_cast %239 : vector<1x2x128xf32> to vector<2x128xf32>
    %241 = arith.truncf %228 : vector<2x32xf32> to vector<2x32xbf16>
    %cst_128 = arith.constant dense<0.000000e+00> : vector<2x128xf32>
    %242 = tpu.matmul %241, %115, %cst_128 {dimension_numbers = #tpu.dot_dimension_numbers<[1], [0], [0], [1], [0, 0, 1, 1], [], []>} : vector<2x32xbf16>, vector<32x128xbf16>, vector<2x128xf32> -> vector<2x128xf32>
    %243 = arith.addf %240, %242 : vector<2x128xf32>
    %244 = arith.negf %243 : vector<2x128xf32>
    %245 = math.exp %244 : vector<2x128xf32>
    %cst_129 = arith.constant 1.000000e+00 : f32
    %246 = vector.broadcast %cst_129 : f32 to vector<2x128xf32>
    %247 = arith.addf %246, %245 : vector<2x128xf32>
    %248 = arith.divf %246, %247 : vector<2x128xf32>
    %249 = vector.extract_strided_slice %248 {offsets = [0, 0], sizes = [2, 32], strides = [1, 1]} : vector<2x128xf32> to vector<2x32xf32>
    %250 = vector.extract_strided_slice %248 {offsets = [0, 32], sizes = [2, 32], strides = [1, 1]} : vector<2x128xf32> to vector<2x32xf32>
    %251 = vector.extract_strided_slice %248 {offsets = [0, 96], sizes = [2, 32], strides = [1, 1]} : vector<2x128xf32> to vector<2x32xf32>
    %252 = vector.extract_strided_slice %243 {offsets = [0, 64], sizes = [2, 32], strides = [1, 1]} : vector<2x128xf32> to vector<2x32xf32>
    %253 = math.tanh %252 : vector<2x32xf32>
    %254 = arith.mulf %250, %226 : vector<2x32xf32>
    %255 = arith.mulf %249, %253 : vector<2x32xf32>
    %256 = arith.addf %254, %255 : vector<2x32xf32>
    %257 = math.tanh %256 : vector<2x32xf32>
    %258 = arith.mulf %251, %257 : vector<2x32xf32>
    %259 = arith.index_cast %c4_i32 : i32 to index
    %c0_130 = arith.constant 0 : index
    %c0_131 = arith.constant 0 : index
    %260 = vector.load %arg14[%259, %c0_130, %c0_131] : memref<8x2x32xf32, #tpu.memory_space<vmem>>, vector<1x2x32xf32>
    %261 = vector.shape_cast %260 : vector<1x2x32xf32> to vector<2x32xf32>
    %262 = vector.shape_cast %258 : vector<2x32xf32> to vector<1x2x32xf32>
    tpu.vector_store %arg14[%259, %c0_130, %c0_131], %262 {strides = array<i32>} : memref<8x2x32xf32, #tpu.memory_space<vmem>>, vector<1x2x32xf32>,
    %c7_i32_132 = arith.constant 7 : i32
    %263 = arith.subi %c7_i32_132, %c4_i32 : i32
    %264 = arith.index_cast %263 : i32 to index
    %c0_133 = arith.constant 0 : index
    %c0_134 = arith.constant 0 : index
    %265 = vector.load %arg15[%264, %c0_133, %c0_134] : memref<8x2x32xf32, #tpu.memory_space<vmem>>, vector<1x2x32xf32>
    %266 = vector.shape_cast %265 : vector<1x2x32xf32> to vector<2x32xf32>
    %267 = vector.shape_cast %258 : vector<2x32xf32> to vector<1x2x32xf32>
    tpu.vector_store %arg15[%264, %c0_133, %c0_134], %267 {strides = array<i32>} : memref<8x2x32xf32, #tpu.memory_space<vmem>>, vector<1x2x32xf32>,
    %c5_i32 = arith.constant 5 : i32
    %268 = arith.index_cast %c5_i32 : i32 to index
    %c0_135 = arith.constant 0 : index
    %c0_136 = arith.constant 0 : index
    %269 = vector.load %arg13[%268, %c0_135, %c0_136] : memref<8x2x128xf32, #tpu.memory_space<vmem>>, vector<1x2x128xf32>
    %270 = vector.shape_cast %269 : vector<1x2x128xf32> to vector<2x128xf32>
    %271 = arith.truncf %258 : vector<2x32xf32> to vector<2x32xbf16>
    %cst_137 = arith.constant dense<0.000000e+00> : vector<2x128xf32>
    %272 = tpu.matmul %271, %115, %cst_137 {dimension_numbers = #tpu.dot_dimension_numbers<[1], [0], [0], [1], [0, 0, 1, 1], [], []>} : vector<2x32xbf16>, vector<32x128xbf16>, vector<2x128xf32> -> vector<2x128xf32>
    %273 = arith.addf %270, %272 : vector<2x128xf32>
    %274 = arith.negf %273 : vector<2x128xf32>
    %275 = math.exp %274 : vector<2x128xf32>
    %cst_138 = arith.constant 1.000000e+00 : f32
    %276 = vector.broadcast %cst_138 : f32 to vector<2x128xf32>
    %277 = arith.addf %276, %275 : vector<2x128xf32>
    %278 = arith.divf %276, %277 : vector<2x128xf32>
    %279 = vector.extract_strided_slice %278 {offsets = [0, 0], sizes = [2, 32], strides = [1, 1]} : vector<2x128xf32> to vector<2x32xf32>
    %280 = vector.extract_strided_slice %278 {offsets = [0, 32], sizes = [2, 32], strides = [1, 1]} : vector<2x128xf32> to vector<2x32xf32>
    %281 = vector.extract_strided_slice %278 {offsets = [0, 96], sizes = [2, 32], strides = [1, 1]} : vector<2x128xf32> to vector<2x32xf32>
    %282 = vector.extract_strided_slice %273 {offsets = [0, 64], sizes = [2, 32], strides = [1, 1]} : vector<2x128xf32> to vector<2x32xf32>
    %283 = math.tanh %282 : vector<2x32xf32>
    %284 = arith.mulf %280, %256 : vector<2x32xf32>
    %285 = arith.mulf %279, %283 : vector<2x32xf32>
    %286 = arith.addf %284, %285 : vector<2x32xf32>
    %287 = math.tanh %286 : vector<2x32xf32>
    %288 = arith.mulf %281, %287 : vector<2x32xf32>
    %289 = arith.index_cast %c5_i32 : i32 to index
    %c0_139 = arith.constant 0 : index
    %c0_140 = arith.constant 0 : index
    %290 = vector.load %arg14[%289, %c0_139, %c0_140] : memref<8x2x32xf32, #tpu.memory_space<vmem>>, vector<1x2x32xf32>
    %291 = vector.shape_cast %290 : vector<1x2x32xf32> to vector<2x32xf32>
    %292 = vector.shape_cast %288 : vector<2x32xf32> to vector<1x2x32xf32>
    tpu.vector_store %arg14[%289, %c0_139, %c0_140], %292 {strides = array<i32>} : memref<8x2x32xf32, #tpu.memory_space<vmem>>, vector<1x2x32xf32>,
    %c7_i32_141 = arith.constant 7 : i32
    %293 = arith.subi %c7_i32_141, %c5_i32 : i32
    %294 = arith.index_cast %293 : i32 to index
    %c0_142 = arith.constant 0 : index
    %c0_143 = arith.constant 0 : index
    %295 = vector.load %arg15[%294, %c0_142, %c0_143] : memref<8x2x32xf32, #tpu.memory_space<vmem>>, vector<1x2x32xf32>
    %296 = vector.shape_cast %295 : vector<1x2x32xf32> to vector<2x32xf32>
    %297 = vector.shape_cast %288 : vector<2x32xf32> to vector<1x2x32xf32>
    tpu.vector_store %arg15[%294, %c0_142, %c0_143], %297 {strides = array<i32>} : memref<8x2x32xf32, #tpu.memory_space<vmem>>, vector<1x2x32xf32>,
    %c6_i32 = arith.constant 6 : i32
    %298 = arith.index_cast %c6_i32 : i32 to index
    %c0_144 = arith.constant 0 : index
    %c0_145 = arith.constant 0 : index
    %299 = vector.load %arg13[%298, %c0_144, %c0_145] : memref<8x2x128xf32, #tpu.memory_space<vmem>>, vector<1x2x128xf32>
    %300 = vector.shape_cast %299 : vector<1x2x128xf32> to vector<2x128xf32>
    %301 = arith.truncf %288 : vector<2x32xf32> to vector<2x32xbf16>
    %cst_146 = arith.constant dense<0.000000e+00> : vector<2x128xf32>
    %302 = tpu.matmul %301, %115, %cst_146 {dimension_numbers = #tpu.dot_dimension_numbers<[1], [0], [0], [1], [0, 0, 1, 1], [], []>} : vector<2x32xbf16>, vector<32x128xbf16>, vector<2x128xf32> -> vector<2x128xf32>
    %303 = arith.addf %300, %302 : vector<2x128xf32>
    %304 = arith.negf %303 : vector<2x128xf32>
    %305 = math.exp %304 : vector<2x128xf32>
    %cst_147 = arith.constant 1.000000e+00 : f32
    %306 = vector.broadcast %cst_147 : f32 to vector<2x128xf32>
    %307 = arith.addf %306, %305 : vector<2x128xf32>
    %308 = arith.divf %306, %307 : vector<2x128xf32>
    %309 = vector.extract_strided_slice %308 {offsets = [0, 0], sizes = [2, 32], strides = [1, 1]} : vector<2x128xf32> to vector<2x32xf32>
    %310 = vector.extract_strided_slice %308 {offsets = [0, 32], sizes = [2, 32], strides = [1, 1]} : vector<2x128xf32> to vector<2x32xf32>
    %311 = vector.extract_strided_slice %308 {offsets = [0, 96], sizes = [2, 32], strides = [1, 1]} : vector<2x128xf32> to vector<2x32xf32>
    %312 = vector.extract_strided_slice %303 {offsets = [0, 64], sizes = [2, 32], strides = [1, 1]} : vector<2x128xf32> to vector<2x32xf32>
    %313 = math.tanh %312 : vector<2x32xf32>
    %314 = arith.mulf %310, %286 : vector<2x32xf32>
    %315 = arith.mulf %309, %313 : vector<2x32xf32>
    %316 = arith.addf %314, %315 : vector<2x32xf32>
    %317 = math.tanh %316 : vector<2x32xf32>
    %318 = arith.mulf %311, %317 : vector<2x32xf32>
    %319 = arith.index_cast %c6_i32 : i32 to index
    %c0_148 = arith.constant 0 : index
    %c0_149 = arith.constant 0 : index
    %320 = vector.load %arg14[%319, %c0_148, %c0_149] : memref<8x2x32xf32, #tpu.memory_space<vmem>>, vector<1x2x32xf32>
    %321 = vector.shape_cast %320 : vector<1x2x32xf32> to vector<2x32xf32>
    %322 = vector.shape_cast %318 : vector<2x32xf32> to vector<1x2x32xf32>
    tpu.vector_store %arg14[%319, %c0_148, %c0_149], %322 {strides = array<i32>} : memref<8x2x32xf32, #tpu.memory_space<vmem>>, vector<1x2x32xf32>,
    %c7_i32_150 = arith.constant 7 : i32
    %323 = arith.subi %c7_i32_150, %c6_i32 : i32
    %324 = arith.index_cast %323 : i32 to index
    %c0_151 = arith.constant 0 : index
    %c0_152 = arith.constant 0 : index
    %325 = vector.load %arg15[%324, %c0_151, %c0_152] : memref<8x2x32xf32, #tpu.memory_space<vmem>>, vector<1x2x32xf32>
    %326 = vector.shape_cast %325 : vector<1x2x32xf32> to vector<2x32xf32>
    %327 = vector.shape_cast %318 : vector<2x32xf32> to vector<1x2x32xf32>
    tpu.vector_store %arg15[%324, %c0_151, %c0_152], %327 {strides = array<i32>} : memref<8x2x32xf32, #tpu.memory_space<vmem>>, vector<1x2x32xf32>,
    %c7_i32_153 = arith.constant 7 : i32
    %328 = arith.index_cast %c7_i32_153 : i32 to index
    %c0_154 = arith.constant 0 : index
    %c0_155 = arith.constant 0 : index
    %329 = vector.load %arg13[%328, %c0_154, %c0_155] : memref<8x2x128xf32, #tpu.memory_space<vmem>>, vector<1x2x128xf32>
    %330 = vector.shape_cast %329 : vector<1x2x128xf32> to vector<2x128xf32>
    %331 = arith.truncf %318 : vector<2x32xf32> to vector<2x32xbf16>
    %cst_156 = arith.constant dense<0.000000e+00> : vector<2x128xf32>
    %332 = tpu.matmul %331, %115, %cst_156 {dimension_numbers = #tpu.dot_dimension_numbers<[1], [0], [0], [1], [0, 0, 1, 1], [], []>} : vector<2x32xbf16>, vector<32x128xbf16>, vector<2x128xf32> -> vector<2x128xf32>
    %333 = arith.addf %330, %332 : vector<2x128xf32>
    %334 = arith.negf %333 : vector<2x128xf32>
    %335 = math.exp %334 : vector<2x128xf32>
    %cst_157 = arith.constant 1.000000e+00 : f32
    %336 = vector.broadcast %cst_157 : f32 to vector<2x128xf32>
    %337 = arith.addf %336, %335 : vector<2x128xf32>
    %338 = arith.divf %336, %337 : vector<2x128xf32>
    %339 = vector.extract_strided_slice %338 {offsets = [0, 0], sizes = [2, 32], strides = [1, 1]} : vector<2x128xf32> to vector<2x32xf32>
    %340 = vector.extract_strided_slice %338 {offsets = [0, 32], sizes = [2, 32], strides = [1, 1]} : vector<2x128xf32> to vector<2x32xf32>
    %341 = vector.extract_strided_slice %338 {offsets = [0, 96], sizes = [2, 32], strides = [1, 1]} : vector<2x128xf32> to vector<2x32xf32>
    %342 = vector.extract_strided_slice %333 {offsets = [0, 64], sizes = [2, 32], strides = [1, 1]} : vector<2x128xf32> to vector<2x32xf32>
    %343 = math.tanh %342 : vector<2x32xf32>
    %344 = arith.mulf %340, %316 : vector<2x32xf32>
    %345 = arith.mulf %339, %343 : vector<2x32xf32>
    %346 = arith.addf %344, %345 : vector<2x32xf32>
    %347 = math.tanh %346 : vector<2x32xf32>
    %348 = arith.mulf %341, %347 : vector<2x32xf32>
    %349 = arith.index_cast %c7_i32_153 : i32 to index
    %c0_158 = arith.constant 0 : index
    %c0_159 = arith.constant 0 : index
    %350 = vector.load %arg14[%349, %c0_158, %c0_159] : memref<8x2x32xf32, #tpu.memory_space<vmem>>, vector<1x2x32xf32>
    %351 = vector.shape_cast %350 : vector<1x2x32xf32> to vector<2x32xf32>
    %352 = vector.shape_cast %348 : vector<2x32xf32> to vector<1x2x32xf32>
    tpu.vector_store %arg14[%349, %c0_158, %c0_159], %352 {strides = array<i32>} : memref<8x2x32xf32, #tpu.memory_space<vmem>>, vector<1x2x32xf32>,
    %c7_i32_160 = arith.constant 7 : i32
    %353 = arith.subi %c7_i32_160, %c7_i32_153 : i32
    %354 = arith.index_cast %353 : i32 to index
    %c0_161 = arith.constant 0 : index
    %c0_162 = arith.constant 0 : index
    %355 = vector.load %arg15[%354, %c0_161, %c0_162] : memref<8x2x32xf32, #tpu.memory_space<vmem>>, vector<1x2x32xf32>
    %356 = vector.shape_cast %355 : vector<1x2x32xf32> to vector<2x32xf32>
    %357 = vector.shape_cast %348 : vector<2x32xf32> to vector<1x2x32xf32>
    tpu.vector_store %arg15[%354, %c0_161, %c0_162], %357 {strides = array<i32>} : memref<8x2x32xf32, #tpu.memory_space<vmem>>, vector<1x2x32xf32>,
    %c8_i32 = arith.constant 8 : i32
    %c0_163 = arith.constant 0 : index
    %c0_164 = arith.constant 0 : index
    %358 = vector.load %arg7[%c0_163, %c0_164] : memref<1x32xf32, #tpu.memory_space<vmem>>, vector<1x32xf32>
    %c0_165 = arith.constant 0 : index
    %c0_166 = arith.constant 0 : index
    %c0_167 = arith.constant 0 : index
    %359 = vector.load %arg14[%c0_165, %c0_166, %c0_167] : memref<8x2x32xf32, #tpu.memory_space<vmem>>, vector<8x2x32xf32>
    %c0_168 = arith.constant 0 : index
    %c0_169 = arith.constant 0 : index
    %c0_170 = arith.constant 0 : index
    %360 = vector.load %arg15[%c0_168, %c0_169, %c0_170] : memref<8x2x32xf32, #tpu.memory_space<vmem>>, vector<8x2x32xf32>
    %361 = vector.extract_strided_slice %359 {offsets = [0, 0, 0], sizes = [8, 2, 16], strides = [1, 1, 1]} : vector<8x2x32xf32> to vector<8x2x16xf32>
    %362 = math.tanh %361 : vector<8x2x16xf32>
    %363 = vector.extract_strided_slice %358 {offsets = [0, 0], sizes = [1, 16], strides = [1, 1]} : vector<1x32xf32> to vector<1x16xf32>
    %364 = vector.shape_cast %363 : vector<1x16xf32> to vector<1x1x16xf32>
    %365 = vector.broadcast %364 : vector<1x1x16xf32> to vector<8x2x16xf32>
    %366 = arith.mulf %362, %365 : vector<8x2x16xf32>
    %cst_171 = arith.constant dense<0.000000e+00> : vector<8x2xf32>
    %367 = vector.multi_reduction <add>, %366, %cst_171 [2] : vector<8x2x16xf32> to vector<8x2xf32>
    %368 = vector.shape_cast %367 : vector<8x2xf32> to vector<8x2x1xf32>
    %369 = vector.extract_strided_slice %360 {offsets = [0, 0, 16], sizes = [8, 2, 16], strides = [1, 1, 1]} : vector<8x2x32xf32> to vector<8x2x16xf32>
    %370 = math.tanh %369 : vector<8x2x16xf32>
    %371 = vector.extract_strided_slice %358 {offsets = [0, 16], sizes = [1, 16], strides = [1, 1]} : vector<1x32xf32> to vector<1x16xf32>
    %372 = vector.shape_cast %371 : vector<1x16xf32> to vector<1x1x16xf32>
    %373 = vector.broadcast %372 : vector<1x1x16xf32> to vector<8x2x16xf32>
    %374 = arith.mulf %370, %373 : vector<8x2x16xf32>
    %cst_172 = arith.constant dense<0.000000e+00> : vector<8x2xf32>
    %375 = vector.multi_reduction <add>, %374, %cst_172 [2] : vector<8x2x16xf32> to vector<8x2xf32>
    %376 = vector.shape_cast %375 : vector<8x2xf32> to vector<8x2x1xf32>
    %377 = arith.addf %368, %376 : vector<8x2x1xf32>
    %cst_173 = arith.constant dense<0xFF800000> : vector<2x1xf32>
    %378 = vector.multi_reduction <maximumf>, %377, %cst_173 [0] : vector<8x2x1xf32> to vector<2x1xf32>
    %379 = vector.shape_cast %378 : vector<2x1xf32> to vector<1x2x1xf32>
    %380 = vector.broadcast %379 : vector<1x2x1xf32> to vector<8x2x1xf32>
    %381 = arith.subf %377, %380 : vector<8x2x1xf32>
    %382 = math.exp %381 : vector<8x2x1xf32>
    %cst_174 = arith.constant dense<0.000000e+00> : vector<2x1xf32>
    %383 = vector.multi_reduction <add>, %382, %cst_174 [0] : vector<8x2x1xf32> to vector<2x1xf32>
    %384 = vector.shape_cast %383 : vector<2x1xf32> to vector<1x2x1xf32>
    %385 = vector.extract_strided_slice %382 {offsets = [7, 0, 0], sizes = [1, 2, 1], strides = [1, 1, 1]} : vector<8x2x1xf32> to vector<1x2x1xf32>
    %386 = vector.shape_cast %385 : vector<1x2x1xf32> to vector<2x1xf32>
    %387 = vector.shape_cast %384 : vector<1x2x1xf32> to vector<2x1xf32>
    %388 = tpu.reciprocal %387 {approx = true} : vector<2x1xf32> -> vector<2x1xf32>
    %389 = arith.mulf %386, %388 : vector<2x1xf32>
    %390 = vector.extract_strided_slice %348 {offsets = [0, 0], sizes = [2, 16], strides = [1, 1]} : vector<2x32xf32> to vector<2x16xf32>
    %391 = vector.extract_strided_slice %360 {offsets = [7, 0, 0], sizes = [1, 2, 32], strides = [1, 1, 1]} : vector<8x2x32xf32> to vector<1x2x32xf32>
    %392 = vector.shape_cast %391 : vector<1x2x32xf32> to vector<2x32xf32>
    %393 = vector.extract_strided_slice %392 {offsets = [0, 16], sizes = [2, 16], strides = [1, 1]} : vector<2x32xf32> to vector<2x16xf32>
    %c0_175 = arith.constant 0 : index
    %c0_176 = arith.constant 0 : index
    %394 = vector.load %arg8[%c0_175, %c0_176] : memref<16x2xf32, #tpu.memory_space<vmem>>, vector<16x2xf32>
    %cst_177 = arith.constant dense<0.000000e+00> : vector<2x2xf32>
    %395 = tpu.matmul %390, %394, %cst_177 {dimension_numbers = #tpu.dot_dimension_numbers<[1], [0], [0], [1], [0, 0, 1, 1], [], []>} : vector<2x16xf32>, vector<16x2xf32>, vector<2x2xf32> -> vector<2x2xf32>
    %c0_178 = arith.constant 0 : index
    %c0_179 = arith.constant 0 : index
    %396 = vector.load %arg9[%c0_178, %c0_179] : memref<16x2xf32, #tpu.memory_space<vmem>>, vector<16x2xf32>
    %cst_180 = arith.constant dense<0.000000e+00> : vector<2x2xf32>
    %397 = tpu.matmul %393, %396, %cst_180 {dimension_numbers = #tpu.dot_dimension_numbers<[1], [0], [0], [1], [0, 0, 1, 1], [], []>} : vector<2x16xf32>, vector<16x2xf32>, vector<2x2xf32> -> vector<2x2xf32>
    %398 = arith.addf %395, %397 : vector<2x2xf32>
    %399 = vector.broadcast %389 : vector<2x1xf32> to vector<2x2xf32>
    %400 = arith.mulf %399, %398 : vector<2x2xf32>
    %c7_181 = arith.constant 7 : index
    %c0_182 = arith.constant 0 : index
    %c0_183 = arith.constant 0 : index
    %401 = vector.load %arg0[%c7_181, %c0_182, %c0_183] : memref<8x2x16xf32, #tpu.memory_space<vmem>>, vector<1x2x16xf32>
    %402 = vector.shape_cast %401 : vector<1x2x16xf32> to vector<2x16xf32>
    %c0_184 = arith.constant 0 : index
    %c0_185 = arith.constant 0 : index
    %403 = vector.load %arg10[%c0_184, %c0_185] : memref<16x2xf32, #tpu.memory_space<vmem>>, vector<16x2xf32>
    %cst_186 = arith.constant dense<0.000000e+00> : vector<2x2xf32>
    %404 = tpu.matmul %402, %403, %cst_186 {dimension_numbers = #tpu.dot_dimension_numbers<[1], [0], [0], [1], [0, 0, 1, 1], [], []>} : vector<2x16xf32>, vector<16x2xf32>, vector<2x2xf32> -> vector<2x2xf32>
    %405 = arith.addf %400, %404 : vector<2x2xf32>
    %c0_187 = arith.constant 0 : index
    %c0_188 = arith.constant 0 : index
    %406 = vector.load %arg11[%c0_187, %c0_188] : memref<1x2xf32, #tpu.memory_space<vmem>>, vector<1x2xf32>
    %407 = vector.broadcast %406 : vector<1x2xf32> to vector<2x2xf32>
    %408 = arith.addf %405, %407 : vector<2x2xf32>
    %c0_189 = arith.constant 0 : index
    %c0_190 = arith.constant 0 : index
    %409 = vector.load %arg12[%c0_189, %c0_190] : memref<2x2xf32, #tpu.memory_space<vmem>>, vector<2x2xf32>
    tpu.vector_store %arg12[%c0_189, %c0_190], %408 {strides = array<i32>} : memref<2x2xf32, #tpu.memory_space<vmem>>, vector<2x2xf32>,
    return
  }
}

</mosaic_0001>

<llo_original>
// kernel: tpu_custom_call.1
$region0: #{tpu_custom_call.1}
  #allocation0 [shape = 'u32[]', space=smem, size = 0x4, offset = 0x4, fixed_abs, tag = 'smem constant byte address 0x4 - core index']
  #allocation1 [shape = 'u32[72,128]{1,0:T(1,128)}', space=vmem, size = 0x9000, scoped, tag = 'internal scratch']
  #allocation2 [shape = 'f32[8,2,128]{2,1,0:T(2,128)}', space=vmem, size = 0x2000, scoped, tag = 'scratch operand']
  #allocation3 [shape = 'f32[8,2,32]{2,1,0:T(2,128)}', space=vmem, size = 0x2000, scoped, tag = 'scratch operand']
  #allocation4 [shape = 'f32[8,2,32]{2,1,0:T(2,128)}', space=vmem, size = 0x2000, scoped, tag = 'scratch operand']
  %s0 = inlined_call_operand.vmem [shape: f32[8,2,16], index: 0, kind: input, shape index: {}]
  %s1 = inlined_call_operand.vmem [shape: bf16[16,128], index: 1, kind: input, shape index: {}]
  %s2 = inlined_call_operand.vmem [shape: bf16[16,128], index: 2, kind: input, shape index: {}]
  %s3 = inlined_call_operand.vmem [shape: bf16[32,128], index: 3, kind: input, shape index: {}]
  %s4 = inlined_call_operand.hbm [shape: f32[1,128], index: 4, kind: input, shape index: {}]
  %s5 = inlined_call_operand.vmem [shape: f32[2,32], index: 5, kind: input, shape index: {}]
  %s6 = inlined_call_operand.vmem [shape: f32[2,32], index: 6, kind: input, shape index: {}]
  %s7 = inlined_call_operand.vmem [shape: f32[1,32], index: 7, kind: input, shape index: {}]
  %s8 = inlined_call_operand.vmem [shape: f32[16,2], index: 8, kind: input, shape index: {}]
  %s9 = inlined_call_operand.vmem [shape: f32[16,2], index: 9, kind: input, shape index: {}]
  %s10 = inlined_call_operand.vmem [shape: f32[16,2], index: 10, kind: input, shape index: {}]
  %s11 = inlined_call_operand.vmem [shape: f32[1,2], index: 11, kind: input, shape index: {}]
  %s12 = inlined_call_operand.hbm [shape: f32[2,2], index: 12, kind: output, shape index: {}]
  %s13 = sld [smem:[#allocation0]]
  $region62: #{tpu_custom_call.1} parent=0
    _
  %s15 = ssub.s32 1, %s13
  %s16 = scalar_select 0, %s15, %s13
  $region1: #{tpu_custom_call.1} parent=0
    #allocation5 [shape = 'u8[512]{0}', space=vmem, size = 0x400, scoped, tag = 'input window, operand 4, single buffered']
    #allocation6 [shape = 's32[1]{0}', space=sflag, size = 0x4, scoped, tag = 'scoped memory for tpu_custom_call.1']
    #allocation7 [shape = 's32[1]{0}', space=sflag, size = 0x4, scoped, tag = 'scoped memory for tpu_custom_call.1']
    #allocation8 [shape = 'u8[1024]{0}', space=vmem, size = 0x400, scoped, tag = 'output window, operand 0, single buffered']
    %17 = vsyncpa [#allocation6], 0
    %18 = vsyncpa [#allocation7], 0
    // Predicated region
    $region2: #{tpu_custom_call.1} parent=1 // pred_check
      _
    $region3: #{tpu_custom_call.1} parent=1 // pred_check_branch
      %20 = sbr.rel (0) target = $region5
    $region4: #{tpu_custom_call.1} parent=1 // pred_region
      _
    $region5: #{tpu_custom_call.1} parent=1 // pred_fallthru
      _
    // Predicated region
    $region6: #{tpu_custom_call.1} parent=1 // pred_check
      _
    $region7: #{tpu_custom_call.1} parent=1 // pred_check_branch
      %22 = sbr.rel (0) target = $region9
    $region8: #{tpu_custom_call.1} parent=1 // pred_region
      _
    $region9: #{tpu_custom_call.1} parent=1 // pred_fallthru
      _
    // Predicated region
    $region10: #{tpu_custom_call.1} parent=1 // pred_check
      _
    $region11: #{tpu_custom_call.1} parent=1 // pred_check_branch
      %24 = sbr.rel (0) target = $region13
    $region12: #{tpu_custom_call.1} parent=1 // pred_region
      _
    $region13: #{tpu_custom_call.1} parent=1 // pred_fallthru
      _
    // Predicated region
    $region14: #{tpu_custom_call.1} parent=1 // pred_check
      _
    $region15: #{tpu_custom_call.1} parent=1 // pred_check_branch
      %26 = sbr.rel (0) target = $region17
    $region16: #{tpu_custom_call.1} parent=1 // pred_region
      _
    $region17: #{tpu_custom_call.1} parent=1 // pred_fallthru
      _
    // Predicated region
    $region18: #{tpu_custom_call.1} parent=1 // pred_check
      _
    $region19: #{tpu_custom_call.1} parent=1 // pred_check_branch
      %28 = sbr.rel (0) target = $region21
    $region20: #{tpu_custom_call.1} parent=1 // pred_region
      %30 = vsyncadd [#allocation6], 0
      %s32 = sshll.u32 %s4, 4
      %s33 = int_to_ptr.hbm [resolvable:$true] %s32
      %s34 = sshll.u32 [#allocation5], 4
      %s35 = int_to_ptr.vmem [resolvable:$true] %s34
      %37 = dma.hbm_to_vmem [thread:$0]  %s33, 16, %s35, [#allocation6]
    $region21: #{tpu_custom_call.1} parent=1 // pred_fallthru
      _
    // Predicated region
    $region22: #{tpu_custom_call.1} parent=1 // pred_check
      _
    $region23: #{tpu_custom_call.1} parent=1 // pred_check_branch
      %39 = sbr.rel (0) target = $region25
    $region24: #{tpu_custom_call.1} parent=1 // pred_region
      _
    $region25: #{tpu_custom_call.1} parent=1 // pred_fallthru
      _
    // Predicated region
    $region26: #{tpu_custom_call.1} parent=1 // pred_check
      _
    $region27: #{tpu_custom_call.1} parent=1 // pred_check_branch
      %41 = sbr.rel (0) target = $region29
    $region28: #{tpu_custom_call.1} parent=1 // pred_region
      _
    $region29: #{tpu_custom_call.1} parent=1 // pred_fallthru
      _
    // Predicated region
    $region30: #{tpu_custom_call.1} parent=1 // pred_check
      _
    $region31: #{tpu_custom_call.1} parent=1 // pred_check_branch
      %43 = sbr.rel (0) target = $region33
    $region32: #{tpu_custom_call.1} parent=1 // pred_region
      _
    $region33: #{tpu_custom_call.1} parent=1 // pred_fallthru
      _
    // Predicated region
    $region34: #{tpu_custom_call.1} parent=1 // pred_check
      _
    $region35: #{tpu_custom_call.1} parent=1 // pred_check_branch
      %45 = sbr.rel (0) target = $region37
    $region36: #{tpu_custom_call.1} parent=1 // pred_region
      _
    $region37: #{tpu_custom_call.1} parent=1 // pred_fallthru
      _
    // Predicated region
    $region38: #{tpu_custom_call.1} parent=1 // pred_check
      _
    $region39: #{tpu_custom_call.1} parent=1 // pred_check_branch
      %47 = sbr.rel (0) target = $region41
    $region40: #{tpu_custom_call.1} parent=1 // pred_region
      _
    $region41: #{tpu_custom_call.1} parent=1 // pred_fallthru
      _
    // Predicated region
    $region42: #{tpu_custom_call.1} parent=1 // pred_check
      _
    $region43: #{tpu_custom_call.1} parent=1 // pred_check_branch
      %49 = sbr.rel (0) target = $region45
    $region44: #{tpu_custom_call.1} parent=1 // pred_region
      _
    $region45: #{tpu_custom_call.1} parent=1 // pred_fallthru
      _
    // Predicated region
    $region46: #{tpu_custom_call.1} parent=1 // pred_check
      _
    $region47: #{tpu_custom_call.1} parent=1 // pred_check_branch
      %51 = sbr.rel (0) target = $region49
    $region48: #{tpu_custom_call.1} parent=1 // pred_region
      _
    $region49: #{tpu_custom_call.1} parent=1 // pred_fallthru
      _
    // Predicated region
    $region50: #{tpu_custom_call.1} parent=1 // pred_check
      _
    $region51: #{tpu_custom_call.1} parent=1 // pred_check_branch
      %53 = sbr.rel (0) target = $region53
    $region52: #{tpu_custom_call.1} parent=1 // pred_region
      %55 = dma.done [#allocation6], 16
    $region53: #{tpu_custom_call.1} parent=1 // pred_fallthru
      _
    %v57 = vld [vmem:[%s1] sm:$0xf]
    %v58 = vld [vmem:[%s1 + $0x4] sm:$0xf]
    %v59 = vld [vmem:[%s2] sm:$0xf]
    %v60 = vld [vmem:[%s2 + $0x4] sm:$0xf]
    %v61 = vld [vmem:[#allocation5] sm:$0x1]
    %v62 = vld [vmem:[%s0] sm:$0x3]
    %v63 = vpack.c.bf16 %v62, %v62
    %s64 = scalar_lea.vmem %s0, 14
    %v65 = vld [vmem:[%s64] sm:$0x3]
    %v66 = vpack.c.bf16 %v65, %v65
    %v69 = vunpack.c.l.b16 %v59
    %v70 = vunpack.c.l.b16 %v60
    %v71 = vpack.c.b16 %v70, %v69
    %vm73 = vcmask 130048
    %v75 = vsel %vm73, %v66, 0
    %77 = vmatpush.bf16.msra.mxu0 0
    %78 = vmatpush.bf16.msra.mxu0 0
    %79 = vmatpush.bf16.msra.mxu0 0
    %80 = vmatpush.bf16.msra.mxu0 0
    %81 = vmatpush.bf16.msra.mxu0 0
    %82 = vmatpush.bf16.msra.mxu0 0
    %83 = vmatpush.bf16.msra.mxu0 0
    %84 = vmatpush.bf16.msra.mxu0 %v71
    %85 = vmatmul.bf16.gmra.mxu0 %v75
    %v86 = vpop.f32.mrf.mxu0
    %v87 = vadd.f32 0.0, %v86
    %v88 = vpop.f32.mrf.mxu0
    %89 = vdwg.mxu0
    %v92 = vunpack.c.l.b16 %v57
    %v93 = vunpack.c.l.b16 %v58
    %v94 = vpack.c.b16 %v93, %v92
    %v97 = vsel %vm73, %v63, 0
    %99 = vmatpush.bf16.msra.mxu0 0
    %100 = vmatpush.bf16.msra.mxu0 0
    %101 = vmatpush.bf16.msra.mxu0 0
    %102 = vmatpush.bf16.msra.mxu0 0
    %103 = vmatpush.bf16.msra.mxu0 0
    %104 = vmatpush.bf16.msra.mxu0 0
    %105 = vmatpush.bf16.msra.mxu0 0
    %106 = vmatpush.bf16.msra.mxu0 %v94
    %107 = vmatmul.bf16.gmra.mxu0 %v97
    %v108 = vpop.f32.mrf.mxu0
    %v109 = vadd.f32 %v87, %v108
    %v110 = vpop.f32.mrf.mxu0
    %111 = vdwg.mxu0
    %v113 = vperm.slane %v61, 0
    %v115 = vadd.f32 %v109, %v113
    %116 = vst [vmem:[#allocation2] sm:$0x3] %v115
    %s117 = scalar_lea.vmem %s0, 2
    %v118 = vld [vmem:[%s117] sm:$0x3]
    %v119 = vpack.c.bf16 %v118, %v118
    %s120 = scalar_lea.vmem %s0, 12
    %v121 = vld [vmem:[%s120] sm:$0x3]
    %v122 = vpack.c.bf16 %v121, %v121
    %v124 = vsel %vm73, %v122, 0
    %126 = vmatpush.bf16.msra.mxu0 0
    %127 = vmatpush.bf16.msra.mxu0 0
    %128 = vmatpush.bf16.msra.mxu0 0
    %129 = vmatpush.bf16.msra.mxu0 0
    %130 = vmatpush.bf16.msra.mxu0 0
    %131 = vmatpush.bf16.msra.mxu0 0
    %132 = vmatpush.bf16.msra.mxu0 0
    %133 = vmatpush.bf16.msra.mxu0 %v71
    %134 = vmatmul.bf16.gmra.mxu0 %v124
    %v135 = vpop.f32.mrf.mxu0
    %v136 = vadd.f32 0.0, %v135
    %v137 = vpop.f32.mrf.mxu0
    %138 = vdwg.mxu0
    %v140 = vsel %vm73, %v119, 0
    %142 = vmatpush.bf16.msra.mxu0 0
    %143 = vmatpush.bf16.msra.mxu0 0
    %144 = vmatpush.bf16.msra.mxu0 0
    %145 = vmatpush.bf16.msra.mxu0 0
    %146 = vmatpush.bf16.msra.mxu0 0
    %147 = vmatpush.bf16.msra.mxu0 0
    %148 = vmatpush.bf16.msra.mxu0 0
    %149 = vmatpush.bf16.msra.mxu0 %v94
    %150 = vmatmul.bf16.gmra.mxu0 %v140
    %v151 = vpop.f32.mrf.mxu0
    %v152 = vadd.f32 %v136, %v151
    %v153 = vpop.f32.mrf.mxu0
    %154 = vdwg.mxu0
    %v155 = vadd.f32 %v152, %v113
    %s156 = scalar_lea.vmem [#allocation2], 2
    %157 = vst [vmem:[%s156] sm:$0x3] %v155
    %s158 = scalar_lea.vmem %s0, 4
    %v159 = vld [vmem:[%s158] sm:$0x3]
    %v160 = vpack.c.bf16 %v159, %v159
    %s161 = scalar_lea.vmem %s0, 10
    %v162 = vld [vmem:[%s161] sm:$0x3]
    %v163 = vpack.c.bf16 %v162, %v162
    %v165 = vsel %vm73, %v163, 0
    %167 = vmatpush.bf16.msra.mxu0 0
    %168 = vmatpush.bf16.msra.mxu0 0
    %169 = vmatpush.bf16.msra.mxu0 0
    %170 = vmatpush.bf16.msra.mxu0 0
    %171 = vmatpush.bf16.msra.mxu0 0
    %172 = vmatpush.bf16.msra.mxu0 0
    %173 = vmatpush.bf16.msra.mxu0 0
    %174 = vmatpush.bf16.msra.mxu0 %v71
    %175 = vmatmul.bf16.gmra.mxu0 %v165
    %v176 = vpop.f32.mrf.mxu0
    %v177 = vadd.f32 0.0, %v176
    %v178 = vpop.f32.mrf.mxu0
    %179 = vdwg.mxu0
    %v181 = vsel %vm73, %v160, 0
    %183 = vmatpush.bf16.msra.mxu0 0
    %184 = vmatpush.bf16.msra.mxu0 0
    %185 = vmatpush.bf16.msra.mxu0 0
    %186 = vmatpush.bf16.msra.mxu0 0
    %187 = vmatpush.bf16.msra.mxu0 0
    %188 = vmatpush.bf16.msra.mxu0 0
    %189 = vmatpush.bf16.msra.mxu0 0
    %190 = vmatpush.bf16.msra.mxu0 %v94
    %191 = vmatmul.bf16.gmra.mxu0 %v181
    %v192 = vpop.f32.mrf.mxu0
    %v193 = vadd.f32 %v177, %v192
    %v194 = vpop.f32.mrf.mxu0
    %195 = vdwg.mxu0
    %v196 = vadd.f32 %v193, %v113
    %s197 = scalar_lea.vmem [#allocation2], 4
    %198 = vst [vmem:[%s197] sm:$0x3] %v196
    %s199 = scalar_lea.vmem %s0, 6
    %v200 = vld [vmem:[%s199] sm:$0x3]
    %v201 = vpack.c.bf16 %v200, %v200
    %s202 = scalar_lea.vmem %s0, 8
    %v203 = vld [vmem:[%s202] sm:$0x3]
    %v204 = vpack.c.bf16 %v203, %v203
    %v206 = vsel %vm73, %v204, 0
    %208 = vmatpush.bf16.msra.mxu0 0
    %209 = vmatpush.bf16.msra.mxu0 0
    %210 = vmatpush.bf16.msra.mxu0 0
    %211 = vmatpush.bf16.msra.mxu0 0
    %212 = vmatpush.bf16.msra.mxu0 0
    %213 = vmatpush.bf16.msra.mxu0 0
    %214 = vmatpush.bf16.msra.mxu0 0
    %215 = vmatpush.bf16.msra.mxu0 %v71
    %216 = vmatmul.bf16.gmra.mxu0 %v206
    %v217 = vpop.f32.mrf.mxu0
    %v218 = vadd.f32 0.0, %v217
    %v219 = vpop.f32.mrf.mxu0
    %220 = vdwg.mxu0
    %v222 = vsel %vm73, %v201, 0
    %224 = vmatpush.bf16.msra.mxu0 0
    %225 = vmatpush.bf16.msra.mxu0 0
    %226 = vmatpush.bf16.msra.mxu0 0
    %227 = vmatpush.bf16.msra.mxu0 0
    %228 = vmatpush.bf16.msra.mxu0 0
    %229 = vmatpush.bf16.msra.mxu0 0
    %230 = vmatpush.bf16.msra.mxu0 0
    %231 = vmatpush.bf16.msra.mxu0 %v94
    %232 = vmatmul.bf16.gmra.mxu0 %v222
    %v233 = vpop.f32.mrf.mxu0
    %v234 = vadd.f32 %v218, %v233
    %v235 = vpop.f32.mrf.mxu0
    %236 = vdwg.mxu0
    %v237 = vadd.f32 %v234, %v113
    %s238 = scalar_lea.vmem [#allocation2], 6
    %239 = vst [vmem:[%s238] sm:$0x3] %v237
    %v240 = vld [vmem:[%s202] sm:$0x3]
    %v241 = vpack.c.bf16 %v240, %v240
    %v242 = vld [vmem:[%s199] sm:$0x3]
    %v243 = vpack.c.bf16 %v242, %v242
    %v245 = vsel %vm73, %v243, 0
    %247 = vmatpush.bf16.msra.mxu0 0
    %248 = vmatpush.bf16.msra.mxu0 0
    %249 = vmatpush.bf16.msra.mxu0 0
    %250 = vmatpush.bf16.msra.mxu0 0
    %251 = vmatpush.bf16.msra.mxu0 0
    %252 = vmatpush.bf16.msra.mxu0 0
    %253 = vmatpush.bf16.msra.mxu0 0
    %254 = vmatpush.bf16.msra.mxu0 %v71
    %255 = vmatmul.bf16.gmra.mxu0 %v245
    %v256 = vpop.f32.mrf.mxu0
    %v257 = vadd.f32 0.0, %v256
    %v258 = vpop.f32.mrf.mxu0
    %259 = vdwg.mxu0
    %v261 = vsel %vm73, %v241, 0
    %263 = vmatpush.bf16.msra.mxu0 0
    %264 = vmatpush.bf16.msra.mxu0 0
    %265 = vmatpush.bf16.msra.mxu0 0
    %266 = vmatpush.bf16.msra.mxu0 0
    %267 = vmatpush.bf16.msra.mxu0 0
    %268 = vmatpush.bf16.msra.mxu0 0
    %269 = vmatpush.bf16.msra.mxu0 0
    %270 = vmatpush.bf16.msra.mxu0 %v94
    %271 = vmatmul.bf16.gmra.mxu0 %v261
    %v272 = vpop.f32.mrf.mxu0
    %v273 = vadd.f32 %v257, %v272
    %v274 = vpop.f32.mrf.mxu0
    %275 = vdwg.mxu0
    %v276 = vadd.f32 %v273, %v113
    %s277 = scalar_lea.vmem [#allocation2], 8
    %278 = vst [vmem:[%s277] sm:$0x3] %v276
    %v279 = vld [vmem:[%s161] sm:$0x3]
    %v280 = vpack.c.bf16 %v279, %v279
    %v281 = vld [vmem:[%s158] sm:$0x3]
    %v282 = vpack.c.bf16 %v281, %v281
    %v284 = vsel %vm73, %v282, 0
    %286 = vmatpush.bf16.msra.mxu0 0
    %287 = vmatpush.bf16.msra.mxu0 0
    %288 = vmatpush.bf16.msra.mxu0 0
    %289 = vmatpush.bf16.msra.mxu0 0
    %290 = vmatpush.bf16.msra.mxu0 0
    %291 = vmatpush.bf16.msra.mxu0 0
    %292 = vmatpush.bf16.msra.mxu0 0
    %293 = vmatpush.bf16.msra.mxu0 %v71
    %294 = vmatmul.bf16.gmra.mxu0 %v284
    %v295 = vpop.f32.mrf.mxu0
    %v296 = vadd.f32 0.0, %v295
    %v297 = vpop.f32.mrf.mxu0
    %298 = vdwg.mxu0
    %v300 = vsel %vm73, %v280, 0
    %302 = vmatpush.bf16.msra.mxu0 0
    %303 = vmatpush.bf16.msra.mxu0 0
    %304 = vmatpush.bf16.msra.mxu0 0
    %305 = vmatpush.bf16.msra.mxu0 0
    %306 = vmatpush.bf16.msra.mxu0 0
    %307 = vmatpush.bf16.msra.mxu0 0
    %308 = vmatpush.bf16.msra.mxu0 0
    %309 = vmatpush.bf16.msra.mxu0 %v94
    %310 = vmatmul.bf16.gmra.mxu0 %v300
    %v311 = vpop.f32.mrf.mxu0
    %v312 = vadd.f32 %v296, %v311
    %v313 = vpop.f32.mrf.mxu0
    %314 = vdwg.mxu0
    %v315 = vadd.f32 %v312, %v113
    %s316 = scalar_lea.vmem [#allocation2], 10
    %317 = vst [vmem:[%s316] sm:$0x3] %v315
    %v318 = vld [vmem:[%s120] sm:$0x3]
    %v319 = vpack.c.bf16 %v318, %v318
    %v320 = vld [vmem:[%s117] sm:$0x3]
    %v321 = vpack.c.bf16 %v320, %v320
    %v323 = vsel %vm73, %v321, 0
    %325 = vmatpush.bf16.msra.mxu0 0
    %326 = vmatpush.bf16.msra.mxu0 0
    %327 = vmatpush.bf16.msra.mxu0 0
    %328 = vmatpush.bf16.msra.mxu0 0
    %329 = vmatpush.bf16.msra.mxu0 0
    %330 = vmatpush.bf16.msra.mxu0 0
    %331 = vmatpush.bf16.msra.mxu0 0
    %332 = vmatpush.bf16.msra.mxu0 %v71
    %333 = vmatmul.bf16.gmra.mxu0 %v323
    %v334 = vpop.f32.mrf.mxu0
    %v335 = vadd.f32 0.0, %v334
    %v336 = vpop.f32.mrf.mxu0
    %337 = vdwg.mxu0
    %v339 = vsel %vm73, %v319, 0
    %341 = vmatpush.bf16.msra.mxu0 0
    %342 = vmatpush.bf16.msra.mxu0 0
    %343 = vmatpush.bf16.msra.mxu0 0
    %344 = vmatpush.bf16.msra.mxu0 0
    %345 = vmatpush.bf16.msra.mxu0 0
    %346 = vmatpush.bf16.msra.mxu0 0
    %347 = vmatpush.bf16.msra.mxu0 0
    %348 = vmatpush.bf16.msra.mxu0 %v94
    %349 = vmatmul.bf16.gmra.mxu0 %v339
    %v350 = vpop.f32.mrf.mxu0
    %v351 = vadd.f32 %v335, %v350
    %v352 = vpop.f32.mrf.mxu0
    %353 = vdwg.mxu0
    %v354 = vadd.f32 %v351, %v113
    %s355 = scalar_lea.vmem [#allocation2], 12
    %356 = vst [vmem:[%s355] sm:$0x3] %v354
    %v357 = vld [vmem:[%s64] sm:$0x3]
    %v358 = vpack.c.bf16 %v357, %v357
    %v359 = vld [vmem:[%s0] sm:$0x3]
    %v360 = vpack.c.bf16 %v359, %v359
    %v362 = vsel %vm73, %v360, 0
    %364 = vmatpush.bf16.msra.mxu0 0
    %365 = vmatpush.bf16.msra.mxu0 0
    %366 = vmatpush.bf16.msra.mxu0 0
    %367 = vmatpush.bf16.msra.mxu0 0
    %368 = vmatpush.bf16.msra.mxu0 0
    %369 = vmatpush.bf16.msra.mxu0 0
    %370 = vmatpush.bf16.msra.mxu0 0
    %371 = vmatpush.bf16.msra.mxu0 %v71
    %372 = vmatmul.bf16.gmra.mxu0 %v362
    %v373 = vpop.f32.mrf.mxu0
    %v374 = vadd.f32 0.0, %v373
    %v375 = vpop.f32.mrf.mxu0
    %376 = vdwg.mxu0
    %v378 = vsel %vm73, %v358, 0
    %380 = vmatpush.bf16.msra.mxu0 0
    %381 = vmatpush.bf16.msra.mxu0 0
    %382 = vmatpush.bf16.msra.mxu0 0
    %383 = vmatpush.bf16.msra.mxu0 0
    %384 = vmatpush.bf16.msra.mxu0 0
    %385 = vmatpush.bf16.msra.mxu0 0
    %386 = vmatpush.bf16.msra.mxu0 0
    %387 = vmatpush.bf16.msra.mxu0 %v94
    %388 = vmatmul.bf16.gmra.mxu0 %v378
    %v389 = vpop.f32.mrf.mxu0
    %v390 = vadd.f32 %v374, %v389
    %v391 = vpop.f32.mrf.mxu0
    %392 = vdwg.mxu0
    %v393 = vadd.f32 %v390, %v113
    %s394 = scalar_lea.vmem [#allocation2], 14
    %395 = vst [vmem:[%s394] sm:$0x3] %v393
    %v396 = vld [vmem:[%s3] sm:$0xf]
    %v397 = vld [vmem:[%s3 + $0x4] sm:$0xf]
    %v398 = vld [vmem:[%s3 + $0x8] sm:$0xf]
    %v399 = vld [vmem:[%s3 + $0xc] sm:$0xf]
    %v400 = vld [vmem:[%s5] sm:$0x3]
    %v401 = vld [vmem:[%s6] sm:$0x3]
    %v402 = vld [vmem:[#allocation2] sm:$0x3]
    %v403 = vpack.c.bf16 %v400, %v400
    %v408 = vunpack.c.l.b16 %v396
    %v409 = vunpack.c.l.b16 %v397
    %v410 = vunpack.c.l.b16 %v398
    %v411 = vunpack.c.l.b16 %v399
    %v412 = vpack.c.b16 %v409, %v408
    %v413 = vpack.c.b16 %v411, %v410
    %vm416 = vcmask 261120
    %v418 = vsel %vm416, %v403, 0
    %420 = vmatpush.bf16.msra.mxu0 0
    %421 = vmatpush.bf16.msra.mxu0 0
    %422 = vmatpush.bf16.msra.mxu0 0
    %423 = vmatpush.bf16.msra.mxu0 0
    %424 = vmatpush.bf16.msra.mxu0 0
    %425 = vmatpush.bf16.msra.mxu0 0
    %426 = vmatpush.bf16.msra.mxu0 %v413
    %427 = vmatpush.bf16.msra.mxu0 %v412
    %428 = vmatmul.bf16.gmra.mxu0 %v418
    %v429 = vpop.f32.mrf.mxu0
    %v430 = vadd.f32 0.0, %v429
    %v431 = vpop.f32.mrf.mxu0
    %432 = vdwg.mxu0
    %v433 = vadd.f32 %v402, %v430
    %v434 = vxor.u32 %v433, 2147483648
    %v435 = vmul.f32 %v434, 1.442695
    %v436 = vpow.pop %v435
    %v437 = vadd.f32 %v436, 1.0
    %v438 = vrcp.pop %v437
    %v439 = vmul.f32 %v437, %v438
    %v440 = vsub.f32 1.0, %v439
    %v441 = vmul.f32 %v438, %v440
    %v442 = vadd.f32 %v438, %v441
    %vm443 = vweird.f32 %v437
    %vm444 = vweird.f32 %v438
    %vm445 = vmor %vm443, %vm444
    %v446 = vsel %vm445, %v438, %v442
    %v447 = vand.u32 2147483647, %v437
    %vm448 = vcmp.eq.f32.partialorder %v447, 8.507059e+37
    %v449 = vand.u32 %v437, 2147483648
    %v450 = vor.u32 1.1754944e-38, %v449
    %v451 = vsel %vm448, %v450, %v446
    %v452 = vmul.f32 1.0, %v451
    %v453 = vtanh.pop %v433
    %455 = vrot.lane.b32.xlu0 %v401, 32
    %v456 = vpop.permute.xlu0 %455
    %v458 = vmul.f32 %v452, %v456
    %460 = vrot.lane.b32.xlu0 %v453, 64
    %v461 = vpop.permute.xlu0 %460
    %v463 = vmul.f32 %v452, %v461
    %465 = vrot.lane.b32.xlu0 %v463, 32
    %v466 = vpop.permute.xlu0 %465
    %v468 = vadd.f32 %v458, %v466
    %v469 = vtanh.pop %v468
    %471 = vrot.lane.b32.xlu0 %v469, 64
    %v472 = vpop.permute.xlu0 %471
    %v474 = vmul.f32 %v452, %v472
    %476 = vrot.lane.b32.xlu0 %v474, 32
    %v477 = vpop.permute.xlu0 %476
    %vm479 = vcmask 254976
    %480 = vst.msk [vmem:[#allocation3] sm:$0x3] %vm479, %v477
    %s481 = scalar_lea.vmem [#allocation4], 14
    %482 = vst.msk [vmem:[%s481] sm:$0x3] %vm479, %v477
    %v483 = vld [vmem:[%s156] sm:$0x3]
    %v484 = vpack.c.bf16 %v474, %v474
    %486 = vrot.lane.b32.xlu0 %v484, 32
    %v487 = vpop.permute.xlu0 %486
    %v489 = vsel %vm416, %v487, 0
    %491 = vmatpush.bf16.msra.mxu0 0
    %492 = vmatpush.bf16.msra.mxu0 0
    %493 = vmatpush.bf16.msra.mxu0 0
    %494 = vmatpush.bf16.msra.mxu0 0
    %495 = vmatpush.bf16.msra.mxu0 0
    %496 = vmatpush.bf16.msra.mxu0 0
    %497 = vmatpush.bf16.msra.mxu0 %v413
    %498 = vmatpush.bf16.msra.mxu0 %v412
    %499 = vmatmul.bf16.gmra.mxu0 %v489
    %v500 = vpop.f32.mrf.mxu0
    %v501 = vadd.f32 0.0, %v500
    %v502 = vpop.f32.mrf.mxu0
    %503 = vdwg.mxu0
    %v504 = vadd.f32 %v483, %v501
    %v505 = vxor.u32 %v504, 2147483648
    %v506 = vmul.f32 %v505, 1.442695
    %v507 = vpow.pop %v506
    %v508 = vadd.f32 %v507, 1.0
    %v509 = vrcp.pop %v508
    %v510 = vmul.f32 %v508, %v509
    %v511 = vsub.f32 1.0, %v510
    %v512 = vmul.f32 %v509, %v511
    %v513 = vadd.f32 %v509, %v512
    %vm514 = vweird.f32 %v508
    %vm515 = vweird.f32 %v509
    %vm516 = vmor %vm514, %vm515
    %v517 = vsel %vm516, %v509, %v513
    %v518 = vand.u32 2147483647, %v508
    %vm519 = vcmp.eq.f32.partialorder %v518, 8.507059e+37
    %v520 = vand.u32 %v508, 2147483648
    %v521 = vor.u32 1.1754944e-38, %v520
    %v522 = vsel %vm519, %v521, %v517
    %v523 = vmul.f32 1.0, %v522
    %v524 = vtanh.pop %v504
    %v525 = vmul.f32 %v523, %v468
    %527 = vrot.lane.b32.xlu0 %v524, 64
    %v528 = vpop.permute.xlu0 %527
    %v530 = vmul.f32 %v523, %v528
    %532 = vrot.lane.b32.xlu0 %v530, 32
    %v533 = vpop.permute.xlu0 %532
    %v535 = vadd.f32 %v525, %v533
    %v536 = vtanh.pop %v535
    %538 = vrot.lane.b32.xlu0 %v536, 64
    %v539 = vpop.permute.xlu0 %538
    %v541 = vmul.f32 %v523, %v539
    %543 = vrot.lane.b32.xlu0 %v541, 32
    %v544 = vpop.permute.xlu0 %543
    %s546 = scalar_lea.vmem [#allocation3], 2
    %547 = vst.msk [vmem:[%s546] sm:$0x3] %vm479, %v544
    %s548 = scalar_lea.vmem [#allocation4], 12
    %549 = vst.msk [vmem:[%s548] sm:$0x3] %vm479, %v544
    %v550 = vld [vmem:[%s197] sm:$0x3]
    %v551 = vpack.c.bf16 %v541, %v541
    %553 = vrot.lane.b32.xlu0 %v551, 32
    %v554 = vpop.permute.xlu0 %553
    %v556 = vsel %vm416, %v554, 0
    %558 = vmatpush.bf16.msra.mxu0 0
    %559 = vmatpush.bf16.msra.mxu0 0
    %560 = vmatpush.bf16.msra.mxu0 0
    %561 = vmatpush.bf16.msra.mxu0 0
    %562 = vmatpush.bf16.msra.mxu0 0
    %563 = vmatpush.bf16.msra.mxu0 0
    %564 = vmatpush.bf16.msra.mxu0 %v413
    %565 = vmatpush.bf16.msra.mxu0 %v412
    %566 = vmatmul.bf16.gmra.mxu0 %v556
    %v567 = vpop.f32.mrf.mxu0
    %v568 = vadd.f32 0.0, %v567
    %v569 = vpop.f32.mrf.mxu0
    %570 = vdwg.mxu0
    %v571 = vadd.f32 %v550, %v568
    %v572 = vxor.u32 %v571, 2147483648
    %v573 = vmul.f32 %v572, 1.442695
    %v574 = vpow.pop %v573
    %v575 = vadd.f32 %v574, 1.0
    %v576 = vrcp.pop %v575
    %v577 = vmul.f32 %v575, %v576
    %v578 = vsub.f32 1.0, %v577
    %v579 = vmul.f32 %v576, %v578
    %v580 = vadd.f32 %v576, %v579
    %vm581 = vweird.f32 %v575
    %vm582 = vweird.f32 %v576
    %vm583 = vmor %vm581, %vm582
    %v584 = vsel %vm583, %v576, %v580
    %v585 = vand.u32 2147483647, %v575
    %vm586 = vcmp.eq.f32.partialorder %v585, 8.507059e+37
    %v587 = vand.u32 %v575, 2147483648
    %v588 = vor.u32 1.1754944e-38, %v587
    %v589 = vsel %vm586, %v588, %v584
    %v590 = vmul.f32 1.0, %v589
    %v591 = vtanh.pop %v571
    %v592 = vmul.f32 %v590, %v535
    %594 = vrot.lane.b32.xlu0 %v591, 64
    %v595 = vpop.permute.xlu0 %594
    %v597 = vmul.f32 %v590, %v595
    %599 = vrot.lane.b32.xlu0 %v597, 32
    %v600 = vpop.permute.xlu0 %599
    %v602 = vadd.f32 %v592, %v600
    %v603 = vtanh.pop %v602
    %605 = vrot.lane.b32.xlu0 %v603, 64
    %v606 = vpop.permute.xlu0 %605
    %v608 = vmul.f32 %v590, %v606
    %610 = vrot.lane.b32.xlu0 %v608, 32
    %v611 = vpop.permute.xlu0 %610
    %s613 = scalar_lea.vmem [#allocation3], 4
    %614 = vst.msk [vmem:[%s613] sm:$0x3] %vm479, %v611
    %s615 = scalar_lea.vmem [#allocation4], 10
    %616 = vst.msk [vmem:[%s615] sm:$0x3] %vm479, %v611
    %v617 = vld [vmem:[%s238] sm:$0x3]
    %v618 = vpack.c.bf16 %v608, %v608
    %620 = vrot.lane.b32.xlu0 %v618, 32
    %v621 = vpop.permute.xlu0 %620
    %v623 = vsel %vm416, %v621, 0
    %625 = vmatpush.bf16.msra.mxu0 0
    %626 = vmatpush.bf16.msra.mxu0 0
    %627 = vmatpush.bf16.msra.mxu0 0
    %628 = vmatpush.bf16.msra.mxu0 0
    %629 = vmatpush.bf16.msra.mxu0 0
    %630 = vmatpush.bf16.msra.mxu0 0
    %631 = vmatpush.bf16.msra.mxu0 %v413
    %632 = vmatpush.bf16.msra.mxu0 %v412
    %633 = vmatmul.bf16.gmra.mxu0 %v623
    %v634 = vpop.f32.mrf.mxu0
    %v635 = vadd.f32 0.0, %v634
    %v636 = vpop.f32.mrf.mxu0
    %637 = vdwg.mxu0
    %v638 = vadd.f32 %v617, %v635
    %v639 = vxor.u32 %v638, 2147483648
    %v640 = vmul.f32 %v639, 1.442695
    %v641 = vpow.pop %v640
    %v642 = vadd.f32 %v641, 1.0
    %v643 = vrcp.pop %v642
    %v644 = vmul.f32 %v642, %v643
    %v645 = vsub.f32 1.0, %v644
    %v646 = vmul.f32 %v643, %v645
    %v647 = vadd.f32 %v643, %v646
    %vm648 = vweird.f32 %v642
    %vm649 = vweird.f32 %v643
    %vm650 = vmor %vm648, %vm649
    %v651 = vsel %vm650, %v643, %v647
    %v652 = vand.u32 2147483647, %v642
    %vm653 = vcmp.eq.f32.partialorder %v652, 8.507059e+37
    %v654 = vand.u32 %v642, 2147483648
    %v655 = vor.u32 1.1754944e-38, %v654
    %v656 = vsel %vm653, %v655, %v651
    %v657 = vmul.f32 1.0, %v656
    %v658 = vtanh.pop %v638
    %v659 = vmul.f32 %v657, %v602
    %661 = vrot.lane.b32.xlu0 %v658, 64
    %v662 = vpop.permute.xlu0 %661
    %v664 = vmul.f32 %v657, %v662
    %666 = vrot.lane.b32.xlu0 %v664, 32
    %v667 = vpop.permute.xlu0 %666
    %v669 = vadd.f32 %v659, %v667
    %v670 = vtanh.pop %v669
    %672 = vrot.lane.b32.xlu0 %v670, 64
    %v673 = vpop.permute.xlu0 %672
    %v675 = vmul.f32 %v657, %v673
    %677 = vrot.lane.b32.xlu0 %v675, 32
    %v678 = vpop.permute.xlu0 %677
    %s680 = scalar_lea.vmem [#allocation3], 6
    %681 = vst.msk [vmem:[%s680] sm:$0x3] %vm479, %v678
    %s682 = scalar_lea.vmem [#allocation4], 8
    %683 = vst.msk [vmem:[%s682] sm:$0x3] %vm479, %v678
    %v684 = vld [vmem:[%s277] sm:$0x3]
    %v685 = vpack.c.bf16 %v675, %v675
    %687 = vrot.lane.b32.xlu0 %v685, 32
    %v688 = vpop.permute.xlu0 %687
    %v690 = vsel %vm416, %v688, 0
    %692 = vmatpush.bf16.msra.mxu0 0
    %693 = vmatpush.bf16.msra.mxu0 0
    %694 = vmatpush.bf16.msra.mxu0 0
    %695 = vmatpush.bf16.msra.mxu0 0
    %696 = vmatpush.bf16.msra.mxu0 0
    %697 = vmatpush.bf16.msra.mxu0 0
    %698 = vmatpush.bf16.msra.mxu0 %v413
    %699 = vmatpush.bf16.msra.mxu0 %v412
    %700 = vmatmul.bf16.gmra.mxu0 %v690
    %v701 = vpop.f32.mrf.mxu0
    %v702 = vadd.f32 0.0, %v701
    %v703 = vpop.f32.mrf.mxu0
    %704 = vdwg.mxu0
    %v705 = vadd.f32 %v684, %v702
    %v706 = vxor.u32 %v705, 2147483648
    %v707 = vmul.f32 %v706, 1.442695
    %v708 = vpow.pop %v707
    %v709 = vadd.f32 %v708, 1.0
    %v710 = vrcp.pop %v709
    %v711 = vmul.f32 %v709, %v710
    %v712 = vsub.f32 1.0, %v711
    %v713 = vmul.f32 %v710, %v712
    %v714 = vadd.f32 %v710, %v713
    %vm715 = vweird.f32 %v709
    %vm716 = vweird.f32 %v710
    %vm717 = vmor %vm715, %vm716
    %v718 = vsel %vm717, %v710, %v714
    %v719 = vand.u32 2147483647, %v709
    %vm720 = vcmp.eq.f32.partialorder %v719, 8.507059e+37
    %v721 = vand.u32 %v709, 2147483648
    %v722 = vor.u32 1.1754944e-38, %v721
    %v723 = vsel %vm720, %v722, %v718
    %v724 = vmul.f32 1.0, %v723
    %v725 = vtanh.pop %v705
    %v726 = vmul.f32 %v724, %v669
    %728 = vrot.lane.b32.xlu0 %v725, 64
    %v729 = vpop.permute.xlu0 %728
    %v731 = vmul.f32 %v724, %v729
    %733 = vrot.lane.b32.xlu0 %v731, 32
    %v734 = vpop.permute.xlu0 %733
    %v736 = vadd.f32 %v726, %v734
    %v737 = vtanh.pop %v736
    %739 = vrot.lane.b32.xlu0 %v737, 64
    %v740 = vpop.permute.xlu0 %739
    %v742 = vmul.f32 %v724, %v740
    %744 = vrot.lane.b32.xlu0 %v742, 32
    %v745 = vpop.permute.xlu0 %744
    %s747 = scalar_lea.vmem [#allocation3], 8
    %748 = vst.msk [vmem:[%s747] sm:$0x3] %vm479, %v745
    %s749 = scalar_lea.vmem [#allocation4], 6
    %750 = vst.msk [vmem:[%s749] sm:$0x3] %vm479, %v745
    %v751 = vld [vmem:[%s316] sm:$0x3]
    %v752 = vpack.c.bf16 %v742, %v742
    %754 = vrot.lane.b32.xlu0 %v752, 32
    %v755 = vpop.permute.xlu0 %754
    %v757 = vsel %vm416, %v755, 0
    %759 = vmatpush.bf16.msra.mxu0 0
    %760 = vmatpush.bf16.msra.mxu0 0
    %761 = vmatpush.bf16.msra.mxu0 0
    %762 = vmatpush.bf16.msra.mxu0 0
    %763 = vmatpush.bf16.msra.mxu0 0
    %764 = vmatpush.bf16.msra.mxu0 0
    %765 = vmatpush.bf16.msra.mxu0 %v413
    %766 = vmatpush.bf16.msra.mxu0 %v412
    %767 = vmatmul.bf16.gmra.mxu0 %v757
    %v768 = vpop.f32.mrf.mxu0
    %v769 = vadd.f32 0.0, %v768
    %v770 = vpop.f32.mrf.mxu0
    %771 = vdwg.mxu0
    %v772 = vadd.f32 %v751, %v769
    %v773 = vxor.u32 %v772, 2147483648
    %v774 = vmul.f32 %v773, 1.442695
    %v775 = vpow.pop %v774
    %v776 = vadd.f32 %v775, 1.0
    %v777 = vrcp.pop %v776
    %v778 = vmul.f32 %v776, %v777
    %v779 = vsub.f32 1.0, %v778
    %v780 = vmul.f32 %v777, %v779
    %v781 = vadd.f32 %v777, %v780
    %vm782 = vweird.f32 %v776
    %vm783 = vweird.f32 %v777
    %vm784 = vmor %vm782, %vm783
    %v785 = vsel %vm784, %v777, %v781
    %v786 = vand.u32 2147483647, %v776
    %vm787 = vcmp.eq.f32.partialorder %v786, 8.507059e+37
    %v788 = vand.u32 %v776, 2147483648
    %v789 = vor.u32 1.1754944e-38, %v788
    %v790 = vsel %vm787, %v789, %v785
    %v791 = vmul.f32 1.0, %v790
    %v792 = vtanh.pop %v772
    %v793 = vmul.f32 %v791, %v736
    %795 = vrot.lane.b32.xlu0 %v792, 64
    %v796 = vpop.permute.xlu0 %795
    %v798 = vmul.f32 %v791, %v796
    %800 = vrot.lane.b32.xlu0 %v798, 32
    %v801 = vpop.permute.xlu0 %800
    %v803 = vadd.f32 %v793, %v801
    %v804 = vtanh.pop %v803
    %806 = vrot.lane.b32.xlu0 %v804, 64
    %v807 = vpop.permute.xlu0 %806
    %v809 = vmul.f32 %v791, %v807
    %811 = vrot.lane.b32.xlu0 %v809, 32
    %v812 = vpop.permute.xlu0 %811
    %s814 = scalar_lea.vmem [#allocation3], 10
    %815 = vst.msk [vmem:[%s814] sm:$0x3] %vm479, %v812
    %s816 = scalar_lea.vmem [#allocation4], 4
    %817 = vst.msk [vmem:[%s816] sm:$0x3] %vm479, %v812
    %v818 = vld [vmem:[%s355] sm:$0x3]
    %v819 = vpack.c.bf16 %v809, %v809
    %821 = vrot.lane.b32.xlu0 %v819, 32
    %v822 = vpop.permute.xlu0 %821
    %v824 = vsel %vm416, %v822, 0
    %826 = vmatpush.bf16.msra.mxu0 0
    %827 = vmatpush.bf16.msra.mxu0 0
    %828 = vmatpush.bf16.msra.mxu0 0
    %829 = vmatpush.bf16.msra.mxu0 0
    %830 = vmatpush.bf16.msra.mxu0 0
    %831 = vmatpush.bf16.msra.mxu0 0
    %832 = vmatpush.bf16.msra.mxu0 %v413
    %833 = vmatpush.bf16.msra.mxu0 %v412
    %834 = vmatmul.bf16.gmra.mxu0 %v824
    %v835 = vpop.f32.mrf.mxu0
    %v836 = vadd.f32 0.0, %v835
    %v837 = vpop.f32.mrf.mxu0
    %838 = vdwg.mxu0
    %v839 = vadd.f32 %v818, %v836
    %v840 = vxor.u32 %v839, 2147483648
    %v841 = vmul.f32 %v840, 1.442695
    %v842 = vpow.pop %v841
    %v843 = vadd.f32 %v842, 1.0
    %v844 = vrcp.pop %v843
    %v845 = vmul.f32 %v843, %v844
    %v846 = vsub.f32 1.0, %v845
    %v847 = vmul.f32 %v844, %v846
    %v848 = vadd.f32 %v844, %v847
    %vm849 = vweird.f32 %v843
    %vm850 = vweird.f32 %v844
    %vm851 = vmor %vm849, %vm850
    %v852 = vsel %vm851, %v844, %v848
    %v853 = vand.u32 2147483647, %v843
    %vm854 = vcmp.eq.f32.partialorder %v853, 8.507059e+37
    %v855 = vand.u32 %v843, 2147483648
    %v856 = vor.u32 1.1754944e-38, %v855
    %v857 = vsel %vm854, %v856, %v852
    %v858 = vmul.f32 1.0, %v857
    %v859 = vtanh.pop %v839
    %v860 = vmul.f32 %v858, %v803
    %862 = vrot.lane.b32.xlu0 %v859, 64
    %v863 = vpop.permute.xlu0 %862
    %v865 = vmul.f32 %v858, %v863
    %867 = vrot.lane.b32.xlu0 %v865, 32
    %v868 = vpop.permute.xlu0 %867
    %v870 = vadd.f32 %v860, %v868
    %v871 = vtanh.pop %v870
    %873 = vrot.lane.b32.xlu0 %v871, 64
    %v874 = vpop.permute.xlu0 %873
    %v876 = vmul.f32 %v858, %v874
    %878 = vrot.lane.b32.xlu0 %v876, 32
    %v879 = vpop.permute.xlu0 %878
    %s881 = scalar_lea.vmem [#allocation3], 12
    %882 = vst.msk [vmem:[%s881] sm:$0x3] %vm479, %v879
    %s883 = scalar_lea.vmem [#allocation4], 2
    %884 = vst.msk [vmem:[%s883] sm:$0x3] %vm479, %v879
    %v885 = vld [vmem:[%s394] sm:$0x3]
    %v886 = vpack.c.bf16 %v876, %v876
    %888 = vrot.lane.b32.xlu0 %v886, 32
    %v889 = vpop.permute.xlu0 %888
    %v891 = vsel %vm416, %v889, 0
    %893 = vmatpush.bf16.msra.mxu0 0
    %894 = vmatpush.bf16.msra.mxu0 0
    %895 = vmatpush.bf16.msra.mxu0 0
    %896 = vmatpush.bf16.msra.mxu0 0
    %897 = vmatpush.bf16.msra.mxu0 0
    %898 = vmatpush.bf16.msra.mxu0 0
    %899 = vmatpush.bf16.msra.mxu0 %v413
    %900 = vmatpush.bf16.msra.mxu0 %v412
    %901 = vmatmul.bf16.gmra.mxu0 %v891
    %v902 = vpop.f32.mrf.mxu0
    %v903 = vadd.f32 0.0, %v902
    %v904 = vpop.f32.mrf.mxu0
    %905 = vdwg.mxu0
    %v906 = vadd.f32 %v885, %v903
    %v907 = vxor.u32 %v906, 2147483648
    %v908 = vmul.f32 %v907, 1.442695
    %v909 = vpow.pop %v908
    %v910 = vadd.f32 %v909, 1.0
    %v911 = vrcp.pop %v910
    %v912 = vmul.f32 %v910, %v911
    %v913 = vsub.f32 1.0, %v912
    %v914 = vmul.f32 %v911, %v913
    %v915 = vadd.f32 %v911, %v914
    %vm916 = vweird.f32 %v910
    %vm917 = vweird.f32 %v911
    %vm918 = vmor %vm916, %vm917
    %v919 = vsel %vm918, %v911, %v915
    %v920 = vand.u32 2147483647, %v910
    %vm921 = vcmp.eq.f32.partialorder %v920, 8.507059e+37
    %v922 = vand.u32 %v910, 2147483648
    %v923 = vor.u32 1.1754944e-38, %v922
    %v924 = vsel %vm921, %v923, %v919
    %v925 = vmul.f32 1.0, %v924
    %v926 = vtanh.pop %v906
    %v927 = vmul.f32 %v925, %v870
    %929 = vrot.lane.b32.xlu0 %v926, 64
    %v930 = vpop.permute.xlu0 %929
    %v932 = vmul.f32 %v925, %v930
    %934 = vrot.lane.b32.xlu0 %v932, 32
    %v935 = vpop.permute.xlu0 %934
    %v937 = vadd.f32 %v927, %v935
    %v938 = vtanh.pop %v937
    %940 = vrot.lane.b32.xlu0 %v938, 64
    %v941 = vpop.permute.xlu0 %940
    %v943 = vmul.f32 %v925, %v941
    %945 = vrot.lane.b32.xlu0 %v943, 32
    %v946 = vpop.permute.xlu0 %945
    %s948 = scalar_lea.vmem [#allocation3], 14
    %949 = vst.msk [vmem:[%s948] sm:$0x3] %vm479, %v946
    %950 = vst.msk [vmem:[#allocation4] sm:$0x3] %vm479, %v946
    %v951 = vld [vmem:[%s7] sm:$0x1]
    %v952 = vld [vmem:[#allocation3] sm:$0x3]
    %v953 = vld [vmem:[#allocation3 + $0x2] sm:$0x3]
    %v954 = vld [vmem:[#allocation3 + $0x4] sm:$0x3]
    %v955 = vld [vmem:[#allocation3 + $0x6] sm:$0x3]
    %v956 = vld [vmem:[#allocation3 + $0x8] sm:$0x3]
    %v957 = vld [vmem:[#allocation3 + $0xa] sm:$0x3]
    %v958 = vld [vmem:[#allocation3 + $0xc] sm:$0x3]
    %v959 = vld [vmem:[#allocation3 + $0xe] sm:$0x3]
    %v960 = vld [vmem:[#allocation4] sm:$0x3]
    %v961 = vld [vmem:[#allocation4 + $0x2] sm:$0x3]
    %v962 = vld [vmem:[#allocation4 + $0x4] sm:$0x3]
    %v963 = vld [vmem:[#allocation4 + $0x6] sm:$0x3]
    %v964 = vld [vmem:[#allocation4 + $0x8] sm:$0x3]
    %v965 = vld [vmem:[#allocation4 + $0xa] sm:$0x3]
    %v966 = vld [vmem:[#allocation4 + $0xc] sm:$0x3]
    %v967 = vld [vmem:[#allocation4 + $0xe] sm:$0x3]
    %v968 = vtanh.pop %v952
    %v969 = vtanh.pop %v953
    %v970 = vtanh.pop %v954
    %v971 = vtanh.pop %v955
    %v972 = vtanh.pop %v956
    %v973 = vtanh.pop %v957
    %v974 = vtanh.pop %v958
    %v975 = vtanh.pop %v959
    %v977 = vperm.slane %v951, 0
    %v979 = vmul.f32 %v968, %v977
    %v980 = vmul.f32 %v969, %v977
    %v981 = vmul.f32 %v970, %v977
    %v982 = vmul.f32 %v971, %v977
    %v983 = vmul.f32 %v972, %v977
    %v984 = vmul.f32 %v973, %v977
    %v985 = vmul.f32 %v974, %v977
    %v986 = vmul.f32 %v975, %v977
    %vm987 = vcmask 123904
    %v988 = vsel %vm987, %v979, 0.0
    %989 = vadd.xlane.f32.xlu0 %v988
    %v990 = vpop.xlane.xlu0 %989
    %v991 = vsel %vm987, %v980, 0.0
    %992 = vadd.xlane.f32.xlu0 %v991
    %v993 = vpop.xlane.xlu0 %992
    %v994 = vsel %vm987, %v981, 0.0
    %995 = vadd.xlane.f32.xlu0 %v994
    %v996 = vpop.xlane.xlu0 %995
    %v997 = vsel %vm987, %v982, 0.0
    %998 = vadd.xlane.f32.xlu0 %v997
    %v999 = vpop.xlane.xlu0 %998
    %v1000 = vsel %vm987, %v983, 0.0
    %1001 = vadd.xlane.f32.xlu0 %v1000
    %v1002 = vpop.xlane.xlu0 %1001
    %v1003 = vsel %vm987, %v984, 0.0
    %1004 = vadd.xlane.f32.xlu0 %v1003
    %v1005 = vpop.xlane.xlu0 %1004
    %v1006 = vsel %vm987, %v985, 0.0
    %1007 = vadd.xlane.f32.xlu0 %v1006
    %v1008 = vpop.xlane.xlu0 %1007
    %v1009 = vsel %vm987, %v986, 0.0
    %1010 = vadd.xlane.f32.xlu0 %v1009
    %v1011 = vpop.xlane.xlu0 %1010
    %v1012 = vtanh.pop %v960
    %v1013 = vtanh.pop %v961
    %v1014 = vtanh.pop %v962
    %v1015 = vtanh.pop %v963
    %v1016 = vtanh.pop %v964
    %v1017 = vtanh.pop %v965
    %v1018 = vtanh.pop %v966
    %v1019 = vtanh.pop %v967
    %v1020 = vmul.f32 %v1012, %v977
    %v1021 = vmul.f32 %v1013, %v977
    %v1022 = vmul.f32 %v1014, %v977
    %v1023 = vmul.f32 %v1015, %v977
    %v1024 = vmul.f32 %v1016, %v977
    %v1025 = vmul.f32 %v1017, %v977
    %v1026 = vmul.f32 %v1018, %v977
    %v1027 = vmul.f32 %v1019, %v977
    %1036 = vrot.lane.b32.xlu0 %v1020, 112
    %v1037 = vpop.permute.xlu0 %1036
    %1038 = vrot.lane.b32.xlu0 %v1021, 112
    %v1039 = vpop.permute.xlu0 %1038
    %1040 = vrot.lane.b32.xlu0 %v1022, 112
    %v1041 = vpop.permute.xlu0 %1040
    %1042 = vrot.lane.b32.xlu0 %v1023, 112
    %v1043 = vpop.permute.xlu0 %1042
    %1044 = vrot.lane.b32.xlu0 %v1024, 112
    %v1045 = vpop.permute.xlu0 %1044
    %1046 = vrot.lane.b32.xlu0 %v1025, 112
    %v1047 = vpop.permute.xlu0 %1046
    %1048 = vrot.lane.b32.xlu0 %v1026, 112
    %v1049 = vpop.permute.xlu0 %1048
    %1050 = vrot.lane.b32.xlu0 %v1027, 112
    %v1051 = vpop.permute.xlu0 %1050
    %v1060 = vsel %vm987, %v1037, 0.0
    %1061 = vadd.xlane.f32.xlu0 %v1060
    %v1062 = vpop.xlane.xlu0 %1061
    %v1063 = vsel %vm987, %v1039, 0.0
    %1064 = vadd.xlane.f32.xlu0 %v1063
    %v1065 = vpop.xlane.xlu0 %1064
    %v1066 = vsel %vm987, %v1041, 0.0
    %1067 = vadd.xlane.f32.xlu0 %v1066
    %v1068 = vpop.xlane.xlu0 %1067
    %v1069 = vsel %vm987, %v1043, 0.0
    %1070 = vadd.xlane.f32.xlu0 %v1069
    %v1071 = vpop.xlane.xlu0 %1070
    %v1072 = vsel %vm987, %v1045, 0.0
    %1073 = vadd.xlane.f32.xlu0 %v1072
    %v1074 = vpop.xlane.xlu0 %1073
    %v1075 = vsel %vm987, %v1047, 0.0
    %1076 = vadd.xlane.f32.xlu0 %v1075
    %v1077 = vpop.xlane.xlu0 %1076
    %v1078 = vsel %vm987, %v1049, 0.0
    %1079 = vadd.xlane.f32.xlu0 %v1078
    %v1080 = vpop.xlane.xlu0 %1079
    %v1081 = vsel %vm987, %v1051, 0.0
    %1082 = vadd.xlane.f32.xlu0 %v1081
    %v1083 = vpop.xlane.xlu0 %1082
    %v1084 = vadd.f32 %v990, %v1062
    %v1085 = vadd.f32 %v993, %v1065
    %v1086 = vadd.f32 %v996, %v1068
    %v1087 = vadd.f32 %v999, %v1071
    %v1088 = vadd.f32 %v1002, %v1074
    %v1089 = vadd.f32 %v1005, %v1077
    %v1090 = vadd.f32 %v1008, %v1080
    %v1091 = vadd.f32 %v1011, %v1083
    %vm1092 = vcmask 1041408
    %v1093 = vsel %vm1092, %v1084, -inf
    %v1094 = vsel %vm1092, %v1085, -inf
    %v1095 = vsel %vm1092, %v1086, -inf
    %v1096 = vsel %vm1092, %v1087, -inf
    %v1097 = vsel %vm1092, %v1088, -inf
    %v1098 = vmax.f32 %v1093, %v1097
    %v1099 = vsel %vm1092, %v1089, -inf
    %v1100 = vmax.f32 %v1094, %v1099
    %v1101 = vsel %vm1092, %v1090, -inf
    %v1102 = vmax.f32 %v1095, %v1101
    %v1103 = vsel %vm1092, %v1091, -inf
    %v1104 = vmax.f32 %v1096, %v1103
    %v1105 = vmax.f32 %v1098, %v1100
    %v1106 = vmax.f32 %v1102, %v1104
    %v1107 = vmax.f32 %v1105, %v1106
    %v1108 = vsub.f32 %v1084, %v1107
    %v1109 = vsub.f32 %v1085, %v1107
    %v1110 = vsub.f32 %v1086, %v1107
    %v1111 = vsub.f32 %v1087, %v1107
    %v1112 = vsub.f32 %v1088, %v1107
    %v1113 = vsub.f32 %v1089, %v1107
    %v1114 = vsub.f32 %v1090, %v1107
    %v1115 = vsub.f32 %v1091, %v1107
    %v1116 = vmul.f32 %v1108, 1.442695
    %v1117 = vpow.pop %v1116
    %v1118 = vmul.f32 %v1109, 1.442695
    %v1119 = vpow.pop %v1118
    %v1120 = vmul.f32 %v1110, 1.442695
    %v1121 = vpow.pop %v1120
    %v1122 = vmul.f32 %v1111, 1.442695
    %v1123 = vpow.pop %v1122
    %v1124 = vmul.f32 %v1112, 1.442695
    %v1125 = vpow.pop %v1124
    %v1126 = vmul.f32 %v1113, 1.442695
    %v1127 = vpow.pop %v1126
    %v1128 = vmul.f32 %v1114, 1.442695
    %v1129 = vpow.pop %v1128
    %v1130 = vmul.f32 %v1115, 1.442695
    %v1131 = vpow.pop %v1130
    %v1132 = vsel %vm1092, %v1117, 0.0
    %v1133 = vsel %vm1092, %v1119, 0.0
    %v1134 = vadd.f32 %v1132, %v1133
    %v1135 = vsel %vm1092, %v1121, 0.0
    %v1136 = vadd.f32 %v1134, %v1135
    %v1137 = vsel %vm1092, %v1123, 0.0
    %v1138 = vadd.f32 %v1136, %v1137
    %v1139 = vsel %vm1092, %v1125, 0.0
    %v1140 = vadd.f32 %v1138, %v1139
    %v1141 = vsel %vm1092, %v1127, 0.0
    %v1142 = vadd.f32 %v1140, %v1141
    %v1143 = vsel %vm1092, %v1129, 0.0
    %v1144 = vadd.f32 %v1142, %v1143
    %v1145 = vsel %vm1092, %v1131, 0.0
    %v1146 = vadd.f32 %v1144, %v1145
    %v1147 = vrcp.pop %v1146
    %v1148 = vmul.f32 %v1131, %v1147
    %v1149 = vld [vmem:[%s8] sm:$0xff]
    %v1150 = vld [vmem:[%s8 + $0x8] sm:$0xff]
    %v1151 = vld [vmem:[%s9] sm:$0xff]
    %v1152 = vld [vmem:[%s9 + $0x8] sm:$0xff]
    %1154 = vrot.lane.b32.xlu0 %v967, 112
    %v1155 = vpop.permute.xlu0 %1154
    %v1156 = vsel %vm73, %v1155, 0
    %1158 = vmatpush.msra.mxu0 0.0
    %1159 = vmatpush.msra.mxu0 0.0
    %1160 = vmatpush.msra.mxu0 0.0
    %1161 = vmatpush.msra.mxu0 0.0
    %1162 = vmatpush.msra.mxu0 0.0
    %1163 = vmatpush.msra.mxu0 0.0
    %1164 = vmatpush.msra.mxu0 0.0
    %1165 = vmatpush.msra.mxu0 0.0
    %1166 = vmatpush.msra.mxu0 0.0
    %1167 = vmatpush.msra.mxu0 0.0
    %1168 = vmatpush.msra.mxu0 0.0
    %1169 = vmatpush.msra.mxu0 0.0
    %1170 = vmatpush.msra.mxu0 0.0
    %1171 = vmatpush.msra.mxu0 0.0
    %1172 = vmatpush.msra.mxu0 %v1152
    %1173 = vmatpush.msra.mxu0 %v1151
    %1174 = vmatmul.f32.gmra.mxu0 %v1156
    %v1175 = vpop.f32.mrf.mxu0
    %v1176 = vadd.f32 0.0, %v1175
    %1177 = vdwg.mxu0
    %v1178 = vsel %vm73, %v946, 0
    %1180 = vmatpush.msra.mxu0 0.0
    %1181 = vmatpush.msra.mxu0 0.0
    %1182 = vmatpush.msra.mxu0 0.0
    %1183 = vmatpush.msra.mxu0 0.0
    %1184 = vmatpush.msra.mxu0 0.0
    %1185 = vmatpush.msra.mxu0 0.0
    %1186 = vmatpush.msra.mxu0 0.0
    %1187 = vmatpush.msra.mxu0 0.0
    %1188 = vmatpush.msra.mxu0 0.0
    %1189 = vmatpush.msra.mxu0 0.0
    %1190 = vmatpush.msra.mxu0 0.0
    %1191 = vmatpush.msra.mxu0 0.0
    %1192 = vmatpush.msra.mxu0 0.0
    %1193 = vmatpush.msra.mxu0 0.0
    %1194 = vmatpush.msra.mxu0 %v1150
    %1195 = vmatpush.msra.mxu0 %v1149
    %1196 = vmatmul.f32.gmra.mxu0 %v1178
    %v1197 = vpop.f32.mrf.mxu0
    %v1198 = vadd.f32 %v1176, %v1197
    %1199 = vdwg.mxu0
    %v1200 = vmul.f32 %v1148, %v1198
    %v1201 = vld [vmem:[%s64] sm:$0x3]
    %v1202 = vld [vmem:[%s10] sm:$0xff]
    %v1203 = vld [vmem:[%s10 + $0x8] sm:$0xff]
    %v1205 = vsel %vm73, %v1201, 0
    %1207 = vmatpush.msra.mxu0 0.0
    %1208 = vmatpush.msra.mxu0 0.0
    %1209 = vmatpush.msra.mxu0 0.0
    %1210 = vmatpush.msra.mxu0 0.0
    %1211 = vmatpush.msra.mxu0 0.0
    %1212 = vmatpush.msra.mxu0 0.0
    %1213 = vmatpush.msra.mxu0 0.0
    %1214 = vmatpush.msra.mxu0 0.0
    %1215 = vmatpush.msra.mxu0 0.0
    %1216 = vmatpush.msra.mxu0 0.0
    %1217 = vmatpush.msra.mxu0 0.0
    %1218 = vmatpush.msra.mxu0 0.0
    %1219 = vmatpush.msra.mxu0 0.0
    %1220 = vmatpush.msra.mxu0 0.0
    %1221 = vmatpush.msra.mxu0 %v1203
    %1222 = vmatpush.msra.mxu0 %v1202
    %1223 = vmatmul.f32.gmra.mxu0 %v1205
    %v1224 = vpop.f32.mrf.mxu0
    %v1225 = vadd.f32 0.0, %v1224
    %1226 = vdwg.mxu0
    %v1227 = vadd.f32 %v1200, %v1225
    %v1228 = vld [vmem:[%s11] sm:$0x1]
    %v1230 = vperm.slane %v1228, 0
    %v1232 = vadd.f32 %v1227, %v1230
    %vm1233 = vcmask 9216
    %1234 = vst.msk [vmem:[#allocation8] sm:$0x3] %vm1233, %v1232
    // Predicated region
    $region54: #{tpu_custom_call.1} parent=1 // pred_check
      _
    $region55: #{tpu_custom_call.1} parent=1 // pred_check_branch
      %1236 = sbr.rel (0) target = $region57
    $region56: #{tpu_custom_call.1} parent=1 // pred_region
      %1238 = vsyncadd [#allocation7], 0
      %s1240 = sshll.u32 [#allocation8], 4
      %s1241 = int_to_ptr.vmem [resolvable:$true] %s1240
      %s1242 = sshll.u32 %s12, 4
      %s1243 = int_to_ptr.hbm [resolvable:$true] %s1242
      %1245 = dma.vmem_to_hbm [thread:$0]  %s1241, 32, %s1243, [#allocation7]
    $region57: #{tpu_custom_call.1} parent=1 // pred_fallthru
      _
    // Predicated region
    $region58: #{tpu_custom_call.1} parent=1 // pred_check
      _
    $region59: #{tpu_custom_call.1} parent=1 // pred_check_branch
      %1247 = sbr.rel (0) target = $region61
    $region60: #{tpu_custom_call.1} parent=1 // pred_region
      %1249 = dma.done [#allocation7], 32
    $region61: #{tpu_custom_call.1} parent=1 // pred_fallthru
      _
    %1250 = vsyncpa [#allocation6], 1
    %1251 = vsyncpa [#allocation7], 1

</llo_original>
